<compile_context>
chip_gen: v7x
topology: tpu7x:2x2x1
jax: 0.10.0
libtpu: 0.0.40
codegen_flags: <defaults>
</compile_context>

<pallas_src>
import jax
import jax.numpy as jnp
from jax import lax
from jax.experimental import pallas as pl
from jax.experimental.pallas import tpu as pltpu


# ------------------------------------------------------------------ helpers

def _identity_grid_flat(H, W):
    """PyTorch F.affine_grid identity grid (align_corners=False), flattened.

    Returns (H*W, 2) with flat index k = i*W + j and last dim = [x_j, y_i],
    x_j = (2j+1)/W - 1, y_i = (2i+1)/H - 1.
    """
    xs = (2.0 * jnp.arange(W, dtype=jnp.float32) + 1.0) / W - 1.0
    ys = (2.0 * jnp.arange(H, dtype=jnp.float32) + 1.0) / H - 1.0
    gx = jnp.tile(xs, H)        # x varies fastest
    gy = jnp.repeat(ys, W)
    return jnp.stack([gx, gy], axis=-1)


def _pick_slab(HW):
    """Largest slab size (multiple of 128) that divides H*W; fall back to HW."""
    for s in (512, 256, 128):
        if HW % s == 0:
            return s
    return HW


# ------------------------------------------------------------------ kernel

def _make_velocity_deform_kernel(H, W, C, NS, SLAB, accuracy, spacing, use_bf16):
    # world -> torch-space per-channel scale (Python floats only, so nothing is
    # captured as a constant array by the kernel trace).
    w2t_x = 2.0 / (spacing[0] * W)
    w2t_y = 2.0 / (spacing[1] * H)
    inv_two_acc = 1.0 / (2.0 ** accuracy)

    def kernel(vel_ref, grid_ref, img_ref, out_ref, v_ref, vnext_ref):
        # vel_ref  : (NS, 2, SLAB) world-space velocity
        # grid_ref : (NS, 2, SLAB) identity grid (normalized coords, [x, y])
        # img_ref  : (NS, C, SLAB)
        # out_ref  : (NS, C, SLAB)
        # v_ref / vnext_ref : (NS, 2, SLAB) f32 scratch (torch-space velocity)

        # Hoisted once per invocation: input-row index within one input slab.
        rows = lax.broadcasted_iota(jnp.int32, (SLAB, SLAB), 0)

        # -- preamble: (velocity / 2**accuracy) converted to torch space
        vel = vel_ref[...]                                     # (NS, 2, SLAB)
        v_ref[:, 0:1, :] = vel[:, 0:1, :] * (w2t_x * inv_two_acc)
        v_ref[:, 1:2, :] = vel[:, 1:2, :] * (w2t_y * inv_two_acc)

        def slab_coords(s):
            """Bilinear corner indices / weights for output slab s (all (1, SLAB))."""
            vs = v_ref[s]                                      # (2, SLAB)
            g = grid_ref[s]                                    # (2, SLAB)
            mx = vs[0:1, :] + g[0:1, :]
            my = vs[1:2, :] + g[1:2, :]
            # grid_sample: align_corners=False, padding_mode='border'
            ix = jnp.clip(((mx + 1.0) * W - 1.0) * 0.5, 0.0, float(W - 1))
            iy = jnp.clip(((my + 1.0) * H - 1.0) * 0.5, 0.0, float(H - 1))
            x0 = jnp.floor(ix)
            y0 = jnp.floor(iy)
            wx1 = ix - x0
            wx0 = 1.0 - wx1
            wy1 = iy - y0
            wy0 = 1.0 - wy1
            x0i = jnp.clip(x0.astype(jnp.int32), 0, W - 1)
            x1i = jnp.minimum(x0i + 1, W - 1)
            y0i = jnp.clip(y0.astype(jnp.int32), 0, H - 1)
            y1i = jnp.minimum(y0i + 1, H - 1)
            f = (y0i * W + x0i, y0i * W + x1i, y1i * W + x0i, y1i * W + x1i)
            w = (wy0 * wx0, wy0 * wx1, wy1 * wx0, wy1 * wx1)
            return vs, f, w

        def s_t_tile(f, w, base):
            # (SLAB_in, SLAB_out) tile of S^T, weights fused into the one-hot compare.
            m = jnp.where(rows == f[0] - base, w[0], 0.0)
            m = m + jnp.where(rows == f[1] - base, w[1], 0.0)
            m = m + jnp.where(rows == f[2] - base, w[2], 0.0)
            m = m + jnp.where(rows == f[3] - base, w[3], 0.0)
            return m

        def mxu(lhs, m):
            if use_bf16:
                lhs = lhs.astype(jnp.bfloat16)
                m = m.astype(jnp.bfloat16)
            return jnp.dot(lhs, m, preferred_element_type=jnp.float32)

        def sample(f, w, lhs_ref):
            # out[:, slab_s] = sum_t lhs[:, slab_t] @ S^T[slab_t, slab_s]
            acc = mxu(lhs_ref[0], s_t_tile(f, w, 0))
            if NS > 1:
                def t_body(t, a):
                    return a + mxu(lhs_ref[t], s_t_tile(f, w, t * SLAB))
                acc = lax.fori_loop(1, NS, t_body, acc, unroll=(NS <= 8))
            return acc

        # -- scaling and squaring (fori_loop bounds live ranges to one iteration)
        def one_slab_update(s, carry):
            vs, f, w = slab_coords(s)
            vnext_ref[s] = vs + sample(f, w, v_ref)
            return carry

        def one_squaring(it, carry):
            lax.fori_loop(0, NS, one_slab_update, 0)
            v_ref[...] = vnext_ref[...]
            return carry

        lax.fori_loop(0, accuracy, one_squaring, 0)

        # -- final image warp.
        # NOTE: the reference's torch->world->torch conversion (v*t2w)*w2t is the
        # exact identity, so it is intentionally skipped here.
        # TODO(synk): XLU roll-based reuse of the x0/y0 one-hot slabs (second-order win).
        def one_out_slab(s, carry):
            _, f, w = slab_coords(s)
            out_ref[s] = sample(f, w, img_ref).astype(out_ref.dtype)
            return carry

        lax.fori_loop(0, NS, one_out_slab, 0)

    return kernel


# ------------------------------------------------------------------ module

class ImiVelocityDeformationPallas:
    """JAX/Pallas equivalent of ImiVelocityDeformation (2D images)."""

    def __init__(self, img_size, spacing=(1.0, 1.0), accuracy=7,
                 mode='bilinear', padding_mode='border', use_bf16_matmul=False):
        assert len(img_size) == 4, "only 2D (NCHW) supported"
        assert len(img_size) - 2 == len(spacing)
        assert mode == 'bilinear'
        assert padding_mode == 'border'
        # TODO(synk): 'nearest' mode, 'zeros'/'reflection' padding and the 3D
        # (NCDHW) path of the PyTorch module are not implemented here.
        self.img_size = tuple(img_size)
        self.spacing = tuple(float(s) for s in spacing)
        self.accuracy = int(accuracy)

        N, C, H, W = self.img_size
        self.N, self.C, self.H, self.W = N, C, H, W
        HW = H * W
        SLAB = _pick_slab(HW)
        NS = HW // SLAB
        self.HW, self.SLAB, self.NS = HW, SLAB, NS

        # identity grid, channel-first, slab-major: (NS, 2, SLAB)
        g = _identity_grid_flat(H, W)                               # (HW, 2) [x, y]
        self.grid_k = jnp.transpose(g).reshape(2, NS, SLAB).transpose(1, 0, 2)

        kernel = _make_velocity_deform_kernel(
            H, W, C, NS, SLAB, self.accuracy, self.spacing, use_bf16_matmul)

        # VMEM budget: the hoisted iota + one S^T tile + where temporaries dominate;
        # everything else is O(HW) slabs.  Double for headroom, keep within defaults+.
        est = (4 * SLAB * SLAB * 4
               + 4 * NS * 8 * SLAB * 4
               + 4 * NS * max(C, 8) * SLAB * 4)
        vmem_limit = int(min(max(2 * est, 32 * 1024 * 1024), 64 * 1024 * 1024))

        self._call = pl.pallas_call(
            kernel,
            out_shape=jax.ShapeDtypeStruct((N, NS, C, SLAB), jnp.float32),
            grid_spec=pltpu.PrefetchScalarGridSpec(
                num_scalar_prefetch=0,
                grid=(N,),
                in_specs=[
                    pl.BlockSpec((None, NS, 2, SLAB), lambda n: (n, 0, 0, 0)),  # velocity
                    pl.BlockSpec((NS, 2, SLAB), lambda n: (0, 0, 0)),           # identity grid
                    pl.BlockSpec((None, NS, C, SLAB), lambda n: (n, 0, 0, 0)),  # image
                ],
                out_specs=pl.BlockSpec((None, NS, C, SLAB), lambda n: (n, 0, 0, 0)),
                scratch_shapes=[pltpu.VMEM((NS, 2, SLAB), jnp.float32),
                                pltpu.VMEM((NS, 2, SLAB), jnp.float32)],
            ),
            compiler_params=pltpu.CompilerParams(
                dimension_semantics=("parallel",),
                vmem_limit_bytes=vmem_limit),
        )

    def __call__(self, image, velocity_field):
        N, C, H, W = self.N, self.C, self.H, self.W
        NS, SLAB = self.NS, self.SLAB
        assert image.shape == (N, C, H, W)
        assert velocity_field.shape == (N, 2, H, W)
        # NCHW -> channel-first flat, slab-major.  Pure layout glue (a reshape when NS == 1).
        img_k = image.astype(jnp.float32).reshape(N, C, NS, SLAB).transpose(0, 2, 1, 3)
        vel_k = velocity_field.astype(jnp.float32).reshape(N, 2, NS, SLAB).transpose(0, 2, 1, 3)
        out_k = self._call(vel_k, self.grid_k, img_k)               # (N, NS, C, SLAB)
        return out_k.transpose(0, 2, 1, 3).reshape(N, C, H, W)


# ------------------------------------------------------------------ pure-JAX reference (sanity check)

def _grid_sample_flat_ref(src, mx, my, H, W):
    """bilinear / border / align_corners=False.  src: (HW, C), mx/my: (HW,)."""
    ix = jnp.clip(((mx + 1.0) * W - 1.0) * 0.5, 0.0, float(W - 1))
    iy = jnp.clip(((my + 1.0) * H - 1.0) * 0.5, 0.0, float(H - 1))
    x0 = jnp.floor(ix)
    y0 = jnp.floor(iy)
    wx1 = ix - x0
    wx0 = 1.0 - wx1
    wy1 = iy - y0
    wy0 = 1.0 - wy1
    x0i = jnp.clip(x0.astype(jnp.int32), 0, W - 1)
    x1i = jnp.clip(x0i + 1, 0, W - 1)
    y0i = jnp.clip(y0.astype(jnp.int32), 0, H - 1)
    y1i = jnp.clip(y0i + 1, 0, H - 1)

    def g(yi, xi):
        return jnp.take(src, yi * W + xi, axis=0)

    return ((wy0 * wx0)[:, None] * g(y0i, x0i)
            + (wy0 * wx1)[:, None] * g(y0i, x1i)
            + (wy1 * wx0)[:, None] * g(y1i, x0i)
            + (wy1 * wx1)[:, None] * g(y1i, x1i))


def reference_forward(image, velocity, spacing, accuracy):
    N, C, H, W = image.shape
    grid = _identity_grid_flat(H, W)
    w2t = jnp.array([2.0 / (spacing[0] * W), 2.0 / (spacing[1] * H)], jnp.float32)
    t2w = jnp.array([0.5 * spacing[0] * W, 0.5 * spacing[1] * H], jnp.float32)
    img_l = jnp.transpose(image, (0, 2, 3, 1)).reshape(N, H * W, C)
    vel_l = jnp.transpose(velocity, (0, 2, 3, 1)).reshape(N, H * W, 2)
    outs = []
    for n in range(N):
        v = (vel_l[n] / (2.0 ** accuracy)) * w2t
        for _ in range(accuracy):
            m = v + grid
            v = v + _grid_sample_flat_ref(v, m[:, 0], m[:, 1], H, W)
        d = (v * t2w) * w2t
        m = d + grid
        outs.append(_grid_sample_flat_ref(img_l[n], m[:, 0], m[:, 1], H, W))
    return jnp.transpose(jnp.stack(outs).reshape(N, H, W, C), (0, 3, 1, 2))


# ------------------------------------------------------------------ main

if __name__ == "__main__":
    N, C, H, W = 2, 4, 16, 16
    accuracy = 7
    spacing = (1.0, 1.0)

    key = jax.random.PRNGKey(0)
    k1, k2 = jax.random.split(key)
    image = jax.random.normal(k1, (N, C, H, W), dtype=jnp.float32)
    # world-space velocity field, a couple of pixels of displacement magnitude
    velocity = 2.0 * jax.random.normal(k2, (N, 2, H, W), dtype=jnp.float32)

    model = ImiVelocityDeformationPallas((N, C, H, W), spacing=spacing, accuracy=accuracy)
    out = model(image, velocity)
    out = jax.block_until_ready(out)

    assert out.shape == (N, C, H, W)
    assert bool(jnp.all(jnp.isfinite(out)))

    ref = reference_forward(image, velocity, spacing, accuracy)
    max_err = float(jnp.max(jnp.abs(out - ref)))
    if max_err > 2e-2:
        raise SystemExit(f"kernel/reference mismatch: max abs err = {max_err}")

    print("KERNEL_OK")
</pallas_src>

<mosaic_0001>
module attributes {stable_mosaic.version = 11 : i64} {
  func.func @kernel(%arg0: i32, %arg1: memref<1x1x2x256xf32, #tpu.memory_space<vmem>>, %arg2: memref<1x2x256xf32, #tpu.memory_space<vmem>>, %arg3: memref<1x1x4x256xf32, #tpu.memory_space<vmem>>, %arg4: memref<1x1x4x256xf32, #tpu.memory_space<vmem>>, %arg5: memref<1x2x256xf32, #tpu.memory_space<vmem>>, %arg6: memref<1x2x256xf32, #tpu.memory_space<vmem>>) attributes {dimension_semantics = [#tpu.dimension_semantics<parallel>], iteration_bounds = array<i64: 2>, scalar_prefetch = 0 : i64, scratch_operands = 2 : i64, tpu.core_type = #tpu.core_type<tc>, window_params = [{transform_indices = @transform_0, window_bounds = array<i64: 1, 1, 2, 256>}, {pipeline_mode = #tpu.pipeline_mode<synchronous>, transform_indices = @transform_1, window_bounds = array<i64: 1, 2, 256>}, {transform_indices = @transform_2, window_bounds = array<i64: 1, 1, 4, 256>}, {transform_indices = @transform_3, window_bounds = array<i64: 1, 1, 4, 256>}]} {
    %0 = tpu.iota {dimensions = array<i32: 0>} : vector<256x256xi32>
    %c0 = arith.constant 0 : index
    %c0_0 = arith.constant 0 : index
    %c0_1 = arith.constant 0 : index
    %c0_2 = arith.constant 0 : index
    %1 = vector.load %arg1[%c0, %c0_0, %c0_1, %c0_2] : memref<1x1x2x256xf32, #tpu.memory_space<vmem>>, vector<1x1x2x256xf32>
    %2 = vector.shape_cast %1 : vector<1x1x2x256xf32> to vector<1x2x256xf32>
    %3 = vector.extract_strided_slice %2 {offsets = [0, 0, 0], sizes = [1, 1, 256], strides = [1, 1, 1]} : vector<1x2x256xf32> to vector<1x1x256xf32>
    %cst = arith.constant 9.765625E-4 : f32
    %4 = vector.broadcast %cst : f32 to vector<1x1x256xf32>
    %5 = arith.mulf %3, %4 : vector<1x1x256xf32>
    %c0_3 = arith.constant 0 : index
    %c0_4 = arith.constant 0 : index
    %c0_5 = arith.constant 0 : index
    %6 = vector.load %arg5[%c0_3, %c0_4, %c0_5] : memref<1x2x256xf32, #tpu.memory_space<vmem>>, vector<1x1x256xf32>
    tpu.vector_store %arg5[%c0_3, %c0_4, %c0_5], %5 {strides = array<i32>} : memref<1x2x256xf32, #tpu.memory_space<vmem>>, vector<1x1x256xf32>,
    %7 = vector.extract_strided_slice %2 {offsets = [0, 1, 0], sizes = [1, 1, 256], strides = [1, 1, 1]} : vector<1x2x256xf32> to vector<1x1x256xf32>
    %cst_6 = arith.constant 9.765625E-4 : f32
    %8 = vector.broadcast %cst_6 : f32 to vector<1x1x256xf32>
    %9 = arith.mulf %7, %8 : vector<1x1x256xf32>
    %c0_7 = arith.constant 0 : index
    %c1 = arith.constant 1 : index
    %c0_8 = arith.constant 0 : index
    %10 = vector.load %arg5[%c0_7, %c1, %c0_8] : memref<1x2x256xf32, #tpu.memory_space<vmem>>, vector<1x1x256xf32>
    tpu.vector_store %arg5[%c0_7, %c1, %c0_8], %9 {strides = array<i32>} : memref<1x2x256xf32, #tpu.memory_space<vmem>>, vector<1x1x256xf32>,
    %c0_i32 = arith.constant 0 : i32
    %c7_i32 = arith.constant 7 : i32
    %11 = arith.addi %c0_i32, %c7_i32 : i32
    %c1_i32 = arith.constant 1 : i32
    scf.for %arg7 = %c0_i32 to %11 step %c1_i32  : i32 {
      %c0_i32_55 = arith.constant 0 : i32
      %132 = arith.index_cast %c0_i32_55 : i32 to index
      %c0_56 = arith.constant 0 : index
      %c0_57 = arith.constant 0 : index
      %133 = vector.load %arg5[%132, %c0_56, %c0_57] : memref<1x2x256xf32, #tpu.memory_space<vmem>>, vector<1x2x256xf32>
      %134 = vector.shape_cast %133 : vector<1x2x256xf32> to vector<2x256xf32>
      %135 = arith.index_cast %c0_i32_55 : i32 to index
      %c0_58 = arith.constant 0 : index
      %c0_59 = arith.constant 0 : index
      %136 = vector.load %arg2[%135, %c0_58, %c0_59] : memref<1x2x256xf32, #tpu.memory_space<vmem>>, vector<1x2x256xf32>
      %137 = vector.shape_cast %136 : vector<1x2x256xf32> to vector<2x256xf32>
      %138 = vector.extract_strided_slice %134 {offsets = [0, 0], sizes = [1, 256], strides = [1, 1]} : vector<2x256xf32> to vector<1x256xf32>
      %139 = vector.extract_strided_slice %137 {offsets = [0, 0], sizes = [1, 256], strides = [1, 1]} : vector<2x256xf32> to vector<1x256xf32>
      %140 = arith.addf %138, %139 : vector<1x256xf32>
      %141 = vector.extract_strided_slice %134 {offsets = [1, 0], sizes = [1, 256], strides = [1, 1]} : vector<2x256xf32> to vector<1x256xf32>
      %142 = vector.extract_strided_slice %137 {offsets = [1, 0], sizes = [1, 256], strides = [1, 1]} : vector<2x256xf32> to vector<1x256xf32>
      %143 = arith.addf %141, %142 : vector<1x256xf32>
      %cst_60 = arith.constant 1.000000e+00 : f32
      %144 = vector.broadcast %cst_60 : f32 to vector<1x256xf32>
      %145 = arith.addf %140, %144 : vector<1x256xf32>
      %cst_61 = arith.constant 1.600000e+01 : f32
      %146 = vector.broadcast %cst_61 : f32 to vector<1x256xf32>
      %147 = arith.mulf %145, %146 : vector<1x256xf32>
      %cst_62 = arith.constant 1.000000e+00 : f32
      %148 = vector.broadcast %cst_62 : f32 to vector<1x256xf32>
      %149 = arith.subf %147, %148 : vector<1x256xf32>
      %cst_63 = arith.constant 5.000000e-01 : f32
      %150 = vector.broadcast %cst_63 : f32 to vector<1x256xf32>
      %151 = arith.mulf %149, %150 : vector<1x256xf32>
      %cst_64 = arith.constant 0.000000e+00 : f32
      %cst_65 = arith.constant 1.500000e+01 : f32
      %152 = vector.broadcast %cst_64 : f32 to vector<1x256xf32>
      %153 = arith.maximumf %152, %151 : vector<1x256xf32>
      %154 = vector.broadcast %cst_65 : f32 to vector<1x256xf32>
      %155 = arith.minimumf %154, %153 : vector<1x256xf32>
      %cst_66 = arith.constant 1.000000e+00 : f32
      %156 = vector.broadcast %cst_66 : f32 to vector<1x256xf32>
      %157 = arith.addf %143, %156 : vector<1x256xf32>
      %cst_67 = arith.constant 1.600000e+01 : f32
      %158 = vector.broadcast %cst_67 : f32 to vector<1x256xf32>
      %159 = arith.mulf %157, %158 : vector<1x256xf32>
      %cst_68 = arith.constant 1.000000e+00 : f32
      %160 = vector.broadcast %cst_68 : f32 to vector<1x256xf32>
      %161 = arith.subf %159, %160 : vector<1x256xf32>
      %cst_69 = arith.constant 5.000000e-01 : f32
      %162 = vector.broadcast %cst_69 : f32 to vector<1x256xf32>
      %163 = arith.mulf %161, %162 : vector<1x256xf32>
      %cst_70 = arith.constant 0.000000e+00 : f32
      %cst_71 = arith.constant 1.500000e+01 : f32
      %164 = vector.broadcast %cst_70 : f32 to vector<1x256xf32>
      %165 = arith.maximumf %164, %163 : vector<1x256xf32>
      %166 = vector.broadcast %cst_71 : f32 to vector<1x256xf32>
      %167 = arith.minimumf %166, %165 : vector<1x256xf32>
      %168 = math.floor %155 : vector<1x256xf32>
      %169 = math.floor %167 : vector<1x256xf32>
      %170 = arith.subf %155, %168 : vector<1x256xf32>
      %cst_72 = arith.constant 1.000000e+00 : f32
      %171 = vector.broadcast %cst_72 : f32 to vector<1x256xf32>
      %172 = arith.subf %171, %170 : vector<1x256xf32>
      %173 = arith.subf %167, %169 : vector<1x256xf32>
      %cst_73 = arith.constant 1.000000e+00 : f32
      %174 = vector.broadcast %cst_73 : f32 to vector<1x256xf32>
      %175 = arith.subf %174, %173 : vector<1x256xf32>
      %176 = arith.fptosi %168 : vector<1x256xf32> to vector<1x256xi32>
      %c0_i32_74 = arith.constant 0 : i32
      %c15_i32_75 = arith.constant 15 : i32
      %177 = vector.broadcast %c0_i32_74 : i32 to vector<1x256xi32>
      %178 = arith.maxsi %177, %176 : vector<1x256xi32>
      %179 = vector.broadcast %c15_i32_75 : i32 to vector<1x256xi32>
      %180 = arith.minsi %179, %178 : vector<1x256xi32>
      %c1_i32_76 = arith.constant 1 : i32
      %181 = vector.broadcast %c1_i32_76 : i32 to vector<1x256xi32>
      %182 = arith.addi %180, %181 : vector<1x256xi32>
      %c15_i32_77 = arith.constant 15 : i32
      %183 = vector.broadcast %c15_i32_77 : i32 to vector<1x256xi32>
      %184 = arith.minsi %182, %183 : vector<1x256xi32>
      %185 = arith.fptosi %169 : vector<1x256xf32> to vector<1x256xi32>
      %c0_i32_78 = arith.constant 0 : i32
      %c15_i32_79 = arith.constant 15 : i32
      %186 = vector.broadcast %c0_i32_78 : i32 to vector<1x256xi32>
      %187 = arith.maxsi %186, %185 : vector<1x256xi32>
      %188 = vector.broadcast %c15_i32_79 : i32 to vector<1x256xi32>
      %189 = arith.minsi %188, %187 : vector<1x256xi32>
      %c1_i32_80 = arith.constant 1 : i32
      %190 = vector.broadcast %c1_i32_80 : i32 to vector<1x256xi32>
      %191 = arith.addi %189, %190 : vector<1x256xi32>
      %c15_i32_81 = arith.constant 15 : i32
      %192 = vector.broadcast %c15_i32_81 : i32 to vector<1x256xi32>
      %193 = arith.minsi %191, %192 : vector<1x256xi32>
      %c16_i32_82 = arith.constant 16 : i32
      %194 = vector.broadcast %c16_i32_82 : i32 to vector<1x256xi32>
      %195 = arith.muli %189, %194 : vector<1x256xi32>
      %196 = arith.addi %195, %180 : vector<1x256xi32>
      %c16_i32_83 = arith.constant 16 : i32
      %197 = vector.broadcast %c16_i32_83 : i32 to vector<1x256xi32>
      %198 = arith.muli %189, %197 : vector<1x256xi32>
      %199 = arith.addi %198, %184 : vector<1x256xi32>
      %c16_i32_84 = arith.constant 16 : i32
      %200 = vector.broadcast %c16_i32_84 : i32 to vector<1x256xi32>
      %201 = arith.muli %193, %200 : vector<1x256xi32>
      %202 = arith.addi %201, %180 : vector<1x256xi32>
      %c16_i32_85 = arith.constant 16 : i32
      %203 = vector.broadcast %c16_i32_85 : i32 to vector<1x256xi32>
      %204 = arith.muli %193, %203 : vector<1x256xi32>
      %205 = arith.addi %204, %184 : vector<1x256xi32>
      %206 = arith.mulf %175, %172 : vector<1x256xf32>
      %207 = arith.mulf %175, %170 : vector<1x256xf32>
      %208 = arith.mulf %173, %172 : vector<1x256xf32>
      %209 = arith.mulf %173, %170 : vector<1x256xf32>
      %c0_86 = arith.constant 0 : index
      %c0_87 = arith.constant 0 : index
      %c0_88 = arith.constant 0 : index
      %210 = vector.load %arg5[%c0_86, %c0_87, %c0_88] : memref<1x2x256xf32, #tpu.memory_space<vmem>>, vector<1x2x256xf32>
      %211 = vector.shape_cast %210 : vector<1x2x256xf32> to vector<2x256xf32>
      %c0_i32_89 = arith.constant 0 : i32
      %212 = vector.broadcast %c0_i32_89 : i32 to vector<1x256xi32>
      %213 = arith.subi %196, %212 : vector<1x256xi32>
      %214 = vector.broadcast %213 : vector<1x256xi32> to vector<256x256xi32>
      %215 = arith.cmpi eq, %0, %214 : vector<256x256xi32>
      %cst_90 = arith.constant 0.000000e+00 : f32
      %216 = vector.shape_cast %206 : vector<1x256xf32> to vector<1x256xf32>
      %217 = vector.broadcast %216 : vector<1x256xf32> to vector<256x256xf32>
      %218 = vector.broadcast %cst_90 : f32 to vector<256x256xf32>
      %219 = arith.select %215, %217, %218 : vector<256x256xi1>, vector<256x256xf32>
      %c0_i32_91 = arith.constant 0 : i32
      %220 = vector.broadcast %c0_i32_91 : i32 to vector<1x256xi32>
      %221 = arith.subi %199, %220 : vector<1x256xi32>
      %222 = vector.broadcast %221 : vector<1x256xi32> to vector<256x256xi32>
      %223 = arith.cmpi eq, %0, %222 : vector<256x256xi32>
      %cst_92 = arith.constant 0.000000e+00 : f32
      %224 = vector.shape_cast %207 : vector<1x256xf32> to vector<1x256xf32>
      %225 = vector.broadcast %224 : vector<1x256xf32> to vector<256x256xf32>
      %226 = vector.broadcast %cst_92 : f32 to vector<256x256xf32>
      %227 = arith.select %223, %225, %226 : vector<256x256xi1>, vector<256x256xf32>
      %228 = arith.addf %219, %227 : vector<256x256xf32>
      %c0_i32_93 = arith.constant 0 : i32
      %229 = vector.broadcast %c0_i32_93 : i32 to vector<1x256xi32>
      %230 = arith.subi %202, %229 : vector<1x256xi32>
      %231 = vector.broadcast %230 : vector<1x256xi32> to vector<256x256xi32>
      %232 = arith.cmpi eq, %0, %231 : vector<256x256xi32>
      %cst_94 = arith.constant 0.000000e+00 : f32
      %233 = vector.shape_cast %208 : vector<1x256xf32> to vector<1x256xf32>
      %234 = vector.broadcast %233 : vector<1x256xf32> to vector<256x256xf32>
      %235 = vector.broadcast %cst_94 : f32 to vector<256x256xf32>
      %236 = arith.select %232, %234, %235 : vector<256x256xi1>, vector<256x256xf32>
      %237 = arith.addf %228, %236 : vector<256x256xf32>
      %c0_i32_95 = arith.constant 0 : i32
      %238 = vector.broadcast %c0_i32_95 : i32 to vector<1x256xi32>
      %239 = arith.subi %205, %238 : vector<1x256xi32>
      %240 = vector.broadcast %239 : vector<1x256xi32> to vector<256x256xi32>
      %241 = arith.cmpi eq, %0, %240 : vector<256x256xi32>
      %cst_96 = arith.constant 0.000000e+00 : f32
      %242 = vector.shape_cast %209 : vector<1x256xf32> to vector<1x256xf32>
      %243 = vector.broadcast %242 : vector<1x256xf32> to vector<256x256xf32>
      %244 = vector.broadcast %cst_96 : f32 to vector<256x256xf32>
      %245 = arith.select %241, %243, %244 : vector<256x256xi1>, vector<256x256xf32>
      %246 = arith.addf %237, %245 : vector<256x256xf32>
      %cst_97 = arith.constant dense<0.000000e+00> : vector<2x256xf32>
      %247 = tpu.matmul %211, %246, %cst_97 {dimension_numbers = #tpu.dot_dimension_numbers<[1], [0], [0], [1], [0, 0, 1, 1], [], []>} : vector<2x256xf32>, vector<256x256xf32>, vector<2x256xf32> -> vector<2x256xf32>
      %248 = arith.addf %134, %247 : vector<2x256xf32>
      %249 = arith.index_cast %c0_i32_55 : i32 to index
      %c0_98 = arith.constant 0 : index
      %c0_99 = arith.constant 0 : index
      %250 = vector.load %arg6[%249, %c0_98, %c0_99] : memref<1x2x256xf32, #tpu.memory_space<vmem>>, vector<1x2x256xf32>
      %251 = vector.shape_cast %250 : vector<1x2x256xf32> to vector<2x256xf32>
      %252 = vector.shape_cast %248 : vector<2x256xf32> to vector<1x2x256xf32>
      tpu.vector_store %arg6[%249, %c0_98, %c0_99], %252 {strides = array<i32>} : memref<1x2x256xf32, #tpu.memory_space<vmem>>, vector<1x2x256xf32>,
      %c1_i32_100 = arith.constant 1 : i32
      %c0_101 = arith.constant 0 : index
      %c0_102 = arith.constant 0 : index
      %c0_103 = arith.constant 0 : index
      %253 = vector.load %arg6[%c0_101, %c0_102, %c0_103] : memref<1x2x256xf32, #tpu.memory_space<vmem>>, vector<1x2x256xf32>
      %c0_104 = arith.constant 0 : index
      %c0_105 = arith.constant 0 : index
      %c0_106 = arith.constant 0 : index
      %254 = vector.load %arg5[%c0_104, %c0_105, %c0_106] : memref<1x2x256xf32, #tpu.memory_space<vmem>>, vector<1x2x256xf32>
      tpu.vector_store %arg5[%c0_104, %c0_105, %c0_106], %253 {strides = array<i32>} : memref<1x2x256xf32, #tpu.memory_space<vmem>>, vector<1x2x256xf32>,
    }
    %c0_i32_9 = arith.constant 0 : i32
    %12 = arith.index_cast %c0_i32_9 : i32 to index
    %c0_10 = arith.constant 0 : index
    %c0_11 = arith.constant 0 : index
    %13 = vector.load %arg5[%12, %c0_10, %c0_11] : memref<1x2x256xf32, #tpu.memory_space<vmem>>, vector<1x2x256xf32>
    %14 = vector.shape_cast %13 : vector<1x2x256xf32> to vector<2x256xf32>
    %15 = arith.index_cast %c0_i32_9 : i32 to index
    %c0_12 = arith.constant 0 : index
    %c0_13 = arith.constant 0 : index
    %16 = vector.load %arg2[%15, %c0_12, %c0_13] : memref<1x2x256xf32, #tpu.memory_space<vmem>>, vector<1x2x256xf32>
    %17 = vector.shape_cast %16 : vector<1x2x256xf32> to vector<2x256xf32>
    %18 = vector.extract_strided_slice %14 {offsets = [0, 0], sizes = [1, 256], strides = [1, 1]} : vector<2x256xf32> to vector<1x256xf32>
    %19 = vector.extract_strided_slice %17 {offsets = [0, 0], sizes = [1, 256], strides = [1, 1]} : vector<2x256xf32> to vector<1x256xf32>
    %20 = arith.addf %18, %19 : vector<1x256xf32>
    %21 = vector.extract_strided_slice %14 {offsets = [1, 0], sizes = [1, 256], strides = [1, 1]} : vector<2x256xf32> to vector<1x256xf32>
    %22 = vector.extract_strided_slice %17 {offsets = [1, 0], sizes = [1, 256], strides = [1, 1]} : vector<2x256xf32> to vector<1x256xf32>
    %23 = arith.addf %21, %22 : vector<1x256xf32>
    %cst_14 = arith.constant 1.000000e+00 : f32
    %24 = vector.broadcast %cst_14 : f32 to vector<1x256xf32>
    %25 = arith.addf %20, %24 : vector<1x256xf32>
    %cst_15 = arith.constant 1.600000e+01 : f32
    %26 = vector.broadcast %cst_15 : f32 to vector<1x256xf32>
    %27 = arith.mulf %25, %26 : vector<1x256xf32>
    %cst_16 = arith.constant 1.000000e+00 : f32
    %28 = vector.broadcast %cst_16 : f32 to vector<1x256xf32>
    %29 = arith.subf %27, %28 : vector<1x256xf32>
    %cst_17 = arith.constant 5.000000e-01 : f32
    %30 = vector.broadcast %cst_17 : f32 to vector<1x256xf32>
    %31 = arith.mulf %29, %30 : vector<1x256xf32>
    %cst_18 = arith.constant 0.000000e+00 : f32
    %cst_19 = arith.constant 1.500000e+01 : f32
    %32 = vector.broadcast %cst_18 : f32 to vector<1x256xf32>
    %33 = arith.maximumf %32, %31 : vector<1x256xf32>
    %34 = vector.broadcast %cst_19 : f32 to vector<1x256xf32>
    %35 = arith.minimumf %34, %33 : vector<1x256xf32>
    %cst_20 = arith.constant 1.000000e+00 : f32
    %36 = vector.broadcast %cst_20 : f32 to vector<1x256xf32>
    %37 = arith.addf %23, %36 : vector<1x256xf32>
    %cst_21 = arith.constant 1.600000e+01 : f32
    %38 = vector.broadcast %cst_21 : f32 to vector<1x256xf32>
    %39 = arith.mulf %37, %38 : vector<1x256xf32>
    %cst_22 = arith.constant 1.000000e+00 : f32
    %40 = vector.broadcast %cst_22 : f32 to vector<1x256xf32>
    %41 = arith.subf %39, %40 : vector<1x256xf32>
    %cst_23 = arith.constant 5.000000e-01 : f32
    %42 = vector.broadcast %cst_23 : f32 to vector<1x256xf32>
    %43 = arith.mulf %41, %42 : vector<1x256xf32>
    %cst_24 = arith.constant 0.000000e+00 : f32
    %cst_25 = arith.constant 1.500000e+01 : f32
    %44 = vector.broadcast %cst_24 : f32 to vector<1x256xf32>
    %45 = arith.maximumf %44, %43 : vector<1x256xf32>
    %46 = vector.broadcast %cst_25 : f32 to vector<1x256xf32>
    %47 = arith.minimumf %46, %45 : vector<1x256xf32>
    %48 = math.floor %35 : vector<1x256xf32>
    %49 = math.floor %47 : vector<1x256xf32>
    %50 = arith.subf %35, %48 : vector<1x256xf32>
    %cst_26 = arith.constant 1.000000e+00 : f32
    %51 = vector.broadcast %cst_26 : f32 to vector<1x256xf32>
    %52 = arith.subf %51, %50 : vector<1x256xf32>
    %53 = arith.subf %47, %49 : vector<1x256xf32>
    %cst_27 = arith.constant 1.000000e+00 : f32
    %54 = vector.broadcast %cst_27 : f32 to vector<1x256xf32>
    %55 = arith.subf %54, %53 : vector<1x256xf32>
    %56 = arith.fptosi %48 : vector<1x256xf32> to vector<1x256xi32>
    %c0_i32_28 = arith.constant 0 : i32
    %c15_i32 = arith.constant 15 : i32
    %57 = vector.broadcast %c0_i32_28 : i32 to vector<1x256xi32>
    %58 = arith.maxsi %57, %56 : vector<1x256xi32>
    %59 = vector.broadcast %c15_i32 : i32 to vector<1x256xi32>
    %60 = arith.minsi %59, %58 : vector<1x256xi32>
    %c1_i32_29 = arith.constant 1 : i32
    %61 = vector.broadcast %c1_i32_29 : i32 to vector<1x256xi32>
    %62 = arith.addi %60, %61 : vector<1x256xi32>
    %c15_i32_30 = arith.constant 15 : i32
    %63 = vector.broadcast %c15_i32_30 : i32 to vector<1x256xi32>
    %64 = arith.minsi %62, %63 : vector<1x256xi32>
    %65 = arith.fptosi %49 : vector<1x256xf32> to vector<1x256xi32>
    %c0_i32_31 = arith.constant 0 : i32
    %c15_i32_32 = arith.constant 15 : i32
    %66 = vector.broadcast %c0_i32_31 : i32 to vector<1x256xi32>
    %67 = arith.maxsi %66, %65 : vector<1x256xi32>
    %68 = vector.broadcast %c15_i32_32 : i32 to vector<1x256xi32>
    %69 = arith.minsi %68, %67 : vector<1x256xi32>
    %c1_i32_33 = arith.constant 1 : i32
    %70 = vector.broadcast %c1_i32_33 : i32 to vector<1x256xi32>
    %71 = arith.addi %69, %70 : vector<1x256xi32>
    %c15_i32_34 = arith.constant 15 : i32
    %72 = vector.broadcast %c15_i32_34 : i32 to vector<1x256xi32>
    %73 = arith.minsi %71, %72 : vector<1x256xi32>
    %c16_i32 = arith.constant 16 : i32
    %74 = vector.broadcast %c16_i32 : i32 to vector<1x256xi32>
    %75 = arith.muli %69, %74 : vector<1x256xi32>
    %76 = arith.addi %75, %60 : vector<1x256xi32>
    %c16_i32_35 = arith.constant 16 : i32
    %77 = vector.broadcast %c16_i32_35 : i32 to vector<1x256xi32>
    %78 = arith.muli %69, %77 : vector<1x256xi32>
    %79 = arith.addi %78, %64 : vector<1x256xi32>
    %c16_i32_36 = arith.constant 16 : i32
    %80 = vector.broadcast %c16_i32_36 : i32 to vector<1x256xi32>
    %81 = arith.muli %73, %80 : vector<1x256xi32>
    %82 = arith.addi %81, %60 : vector<1x256xi32>
    %c16_i32_37 = arith.constant 16 : i32
    %83 = vector.broadcast %c16_i32_37 : i32 to vector<1x256xi32>
    %84 = arith.muli %73, %83 : vector<1x256xi32>
    %85 = arith.addi %84, %64 : vector<1x256xi32>
    %86 = arith.mulf %55, %52 : vector<1x256xf32>
    %87 = arith.mulf %55, %50 : vector<1x256xf32>
    %88 = arith.mulf %53, %52 : vector<1x256xf32>
    %89 = arith.mulf %53, %50 : vector<1x256xf32>
    %c0_38 = arith.constant 0 : index
    %c0_39 = arith.constant 0 : index
    %c0_40 = arith.constant 0 : index
    %c0_41 = arith.constant 0 : index
    %90 = vector.load %arg3[%c0_38, %c0_39, %c0_40, %c0_41] : memref<1x1x4x256xf32, #tpu.memory_space<vmem>>, vector<1x1x4x256xf32>
    %91 = vector.shape_cast %90 : vector<1x1x4x256xf32> to vector<4x256xf32>
    %c0_i32_42 = arith.constant 0 : i32
    %92 = vector.broadcast %c0_i32_42 : i32 to vector<1x256xi32>
    %93 = arith.subi %76, %92 : vector<1x256xi32>
    %94 = vector.broadcast %93 : vector<1x256xi32> to vector<256x256xi32>
    %95 = arith.cmpi eq, %0, %94 : vector<256x256xi32>
    %cst_43 = arith.constant 0.000000e+00 : f32
    %96 = vector.shape_cast %86 : vector<1x256xf32> to vector<1x256xf32>
    %97 = vector.broadcast %96 : vector<1x256xf32> to vector<256x256xf32>
    %98 = vector.broadcast %cst_43 : f32 to vector<256x256xf32>
    %99 = arith.select %95, %97, %98 : vector<256x256xi1>, vector<256x256xf32>
    %c0_i32_44 = arith.constant 0 : i32
    %100 = vector.broadcast %c0_i32_44 : i32 to vector<1x256xi32>
    %101 = arith.subi %79, %100 : vector<1x256xi32>
    %102 = vector.broadcast %101 : vector<1x256xi32> to vector<256x256xi32>
    %103 = arith.cmpi eq, %0, %102 : vector<256x256xi32>
    %cst_45 = arith.constant 0.000000e+00 : f32
    %104 = vector.shape_cast %87 : vector<1x256xf32> to vector<1x256xf32>
    %105 = vector.broadcast %104 : vector<1x256xf32> to vector<256x256xf32>
    %106 = vector.broadcast %cst_45 : f32 to vector<256x256xf32>
    %107 = arith.select %103, %105, %106 : vector<256x256xi1>, vector<256x256xf32>
    %108 = arith.addf %99, %107 : vector<256x256xf32>
    %c0_i32_46 = arith.constant 0 : i32
    %109 = vector.broadcast %c0_i32_46 : i32 to vector<1x256xi32>
    %110 = arith.subi %82, %109 : vector<1x256xi32>
    %111 = vector.broadcast %110 : vector<1x256xi32> to vector<256x256xi32>
    %112 = arith.cmpi eq, %0, %111 : vector<256x256xi32>
    %cst_47 = arith.constant 0.000000e+00 : f32
    %113 = vector.shape_cast %88 : vector<1x256xf32> to vector<1x256xf32>
    %114 = vector.broadcast %113 : vector<1x256xf32> to vector<256x256xf32>
    %115 = vector.broadcast %cst_47 : f32 to vector<256x256xf32>
    %116 = arith.select %112, %114, %115 : vector<256x256xi1>, vector<256x256xf32>
    %117 = arith.addf %108, %116 : vector<256x256xf32>
    %c0_i32_48 = arith.constant 0 : i32
    %118 = vector.broadcast %c0_i32_48 : i32 to vector<1x256xi32>
    %119 = arith.subi %85, %118 : vector<1x256xi32>
    %120 = vector.broadcast %119 : vector<1x256xi32> to vector<256x256xi32>
    %121 = arith.cmpi eq, %0, %120 : vector<256x256xi32>
    %cst_49 = arith.constant 0.000000e+00 : f32
    %122 = vector.shape_cast %89 : vector<1x256xf32> to vector<1x256xf32>
    %123 = vector.broadcast %122 : vector<1x256xf32> to vector<256x256xf32>
    %124 = vector.broadcast %cst_49 : f32 to vector<256x256xf32>
    %125 = arith.select %121, %123, %124 : vector<256x256xi1>, vector<256x256xf32>
    %126 = arith.addf %117, %125 : vector<256x256xf32>
    %cst_50 = arith.constant dense<0.000000e+00> : vector<4x256xf32>
    %127 = tpu.matmul %91, %126, %cst_50 {dimension_numbers = #tpu.dot_dimension_numbers<[1], [0], [0], [1], [0, 0, 1, 1], [], []>} : vector<4x256xf32>, vector<256x256xf32>, vector<4x256xf32> -> vector<4x256xf32>
    %c0_51 = arith.constant 0 : index
    %128 = arith.index_cast %c0_i32_9 : i32 to index
    %c0_52 = arith.constant 0 : index
    %c0_53 = arith.constant 0 : index
    %129 = vector.load %arg4[%c0_51, %128, %c0_52, %c0_53] : memref<1x1x4x256xf32, #tpu.memory_space<vmem>>, vector<1x1x4x256xf32>
    %130 = vector.shape_cast %129 : vector<1x1x4x256xf32> to vector<4x256xf32>
    %131 = vector.shape_cast %127 : vector<4x256xf32> to vector<1x1x4x256xf32>
    tpu.vector_store %arg4[%c0_51, %128, %c0_52, %c0_53], %131 {strides = array<i32>} : memref<1x1x4x256xf32, #tpu.memory_space<vmem>>, vector<1x1x4x256xf32>,
    %c1_i32_54 = arith.constant 1 : i32
    return
  }
  func.func @transform_0(%arg0: i32) -> (i32, i32, i32, i32) {
    %c0_i32 = arith.constant 0 : i32
    %c0_i32_0 = arith.constant 0 : i32
    %c0_i32_1 = arith.constant 0 : i32
    %c0_i32_2 = arith.constant 0 : i32
    return %arg0, %c0_i32, %c0_i32_0, %c0_i32_1 : i32, i32, i32, i32
  }
  func.func @transform_1(%arg0: i32) -> (i32, i32, i32) {
    %c0_i32 = arith.constant 0 : i32
    %c0_i32_0 = arith.constant 0 : i32
    %c0_i32_1 = arith.constant 0 : i32
    %c0_i32_2 = arith.constant 0 : i32
    return %c0_i32, %c0_i32_0, %c0_i32_1 : i32, i32, i32
  }
  func.func @transform_2(%arg0: i32) -> (i32, i32, i32, i32) {
    %c0_i32 = arith.constant 0 : i32
    %c0_i32_0 = arith.constant 0 : i32
    %c0_i32_1 = arith.constant 0 : i32
    %c0_i32_2 = arith.constant 0 : i32
    return %arg0, %c0_i32, %c0_i32_0, %c0_i32_1 : i32, i32, i32, i32
  }
  func.func @transform_3(%arg0: i32) -> (i32, i32, i32, i32) {
    %c0_i32 = arith.constant 0 : i32
    %c0_i32_0 = arith.constant 0 : i32
    %c0_i32_1 = arith.constant 0 : i32
    %c0_i32_2 = arith.constant 0 : i32
    return %arg0, %c0_i32, %c0_i32_0, %c0_i32_1 : i32, i32, i32, i32
  }
}

</mosaic_0001>

<llo_original>
// kernel: tpu_custom_call.1
$region0: #{tpu_custom_call.1}
  #allocation0 [shape = 'u32[]', space=smem, size = 0x4, offset = 0x4, fixed_abs, tag = 'smem constant byte address 0x4 - core index']
  #allocation1 [shape = 'u32[144,128]{1,0:T(1,128)}', space=vmem, size = 0x12000, scoped, tag = 'internal scratch']
  #allocation2 [shape = 'f32[1,2,256]{2,1,0:T(2,128)}', space=vmem, size = 0x800, scoped, tag = 'scratch operand']
  #allocation3 [shape = 'f32[1,2,256]{2,1,0:T(2,128)}', space=vmem, size = 0x800, scoped, tag = 'scratch operand']
  %s0 = inlined_call_operand.hbm [shape: f32[2,1,2,256], index: 0, kind: input, shape index: {}]
  %s1 = inlined_call_operand.hbm [shape: f32[1,2,256], index: 1, kind: input, shape index: {}]
  %s2 = inlined_call_operand.hbm [shape: f32[2,1,4,256], index: 2, kind: input, shape index: {}]
  %s3 = inlined_call_operand.hbm [shape: f32[2,1,4,256], index: 3, kind: output, shape index: {}]
  %s4 = sld [smem:[#allocation0]]
  $region64: #{tpu_custom_call.1} parent=0
    _
  %s6 = ssub.s32 1, %s4
  %s7 = scalar_select 0, %s6, %s4
  $region1: #{tpu_custom_call.1} parent=0
    #allocation4 [shape = 'u8[4096]{0}', space=vmem, size = 0x1000, scoped, tag = 'input window, operand 0']
    #allocation5 [shape = 's32[2]{0}', space=sflag, size = 0x8, scoped, tag = 'scoped memory for tpu_custom_call.1']
    #allocation6 [shape = 's32[2]{0}', space=sflag, size = 0x8, scoped, tag = 'scoped memory for tpu_custom_call.1']
    #allocation7 [shape = 'u8[2048]{0}', space=vmem, size = 0x800, scoped, tag = 'input window, operand 1, single buffered']
    #allocation8 [shape = 's32[1]{0}', space=sflag, size = 0x4, scoped, tag = 'scoped memory for tpu_custom_call.1']
    #allocation9 [shape = 'u8[8192]{0}', space=vmem, size = 0x2000, scoped, tag = 'input window, operand 2']
    #allocation10 [shape = 'u8[8192]{0}', space=vmem, size = 0x2000, scoped, tag = 'output window, operand 0']
    %8 = vsyncpa [#allocation5], 0
    %s9 = scalar_lea.sflag [#allocation5], 1
    %10 = vsyncpa %s9, 0
    %11 = vsyncpa [#allocation8], 0
    %12 = vsyncpa [#allocation6], 0
    %s13 = scalar_lea.sflag [#allocation6], 1
    %14 = vsyncpa %s13, 0
    loop: start=0, step=1, limit=4
    $region2: #{tpu_custom_call.1} parent=1 // loop_pre_header
      _
    $region3: #{tpu_custom_call.1} parent=1 // loop_header
      %s16 = sphi 0, %s20
      %p17 = scmp.ge.s32.totalorder %s16, 4
      %s26 = sphi 0, %s28
      %s29 = sphi 0, %s26
      %s30 = sphi 0, %s29
      %s46 = sphi 0, %s30
      %s50 = sphi 0, %s50
      %s52 = sphi 0, %s50
      %s53 = sphi 0, %s52
      %s67 = sphi 0, %s53
      %s73 = sphi 0, %s75
      %s76 = sphi 0, %s73
      %s77 = sphi 0, %s76
      %s93 = sphi 0, %s77
      %s99 = sphi 0, %s101
      %s102 = sphi 0, %s99
      %s103 = sphi 0, %s102
      %s119 = sphi 0, %s103
    $region4: #{tpu_custom_call.1} parent=1 // loop_header_branch
      %19 = sbr.rel (%p17) target = $region8
    $region5: #{tpu_custom_call.1} parent=1 // loop_body
      %s21 = ssub.s32 %s16, 1
      %s22 = ssub.s32 %s16, 2
      %s23 = sadd.s32 %s16, 1
      %s24 = ssub.s32 %s16, %s23
      %p25 = scmp.eq.s32.totalorder %s24, 0
      %s27 = sadd.s32 %s26, 1
      %s28 = scalar_select %p25, %s26, %s27
      %p31 = pneg %p25
      %p32 = scmp.eq.s32.totalorder %s16, 1
      %p33 = por %p31, %p32
      %p34 = scmp.ne.s32.totalorder %s26, %s29
      %p35 = scmp.eq.s32.totalorder %s16, 0
      %p36 = por %p34, %p35
      %p37 = scmp.ne.s32.totalorder %s26, %s29
      %p38 = scmp.eq.s32.totalorder %s21, 1
      %p39 = por %p37, %p38
      %p40 = scmp.ne.s32.totalorder %s29, %s30
      %p41 = scmp.eq.s32.totalorder %s21, 0
      %p42 = por %p40, %p41
      %p43 = scmp.ne.s32.totalorder %s29, %s30
      %p44 = scmp.eq.s32.totalorder %s22, 1
      %p45 = por %p43, %p44
      %p47 = scmp.ne.s32.totalorder %s30, %s46
      %p48 = scmp.eq.s32.totalorder %s22, 0
      %p49 = por %p47, %p48
      %s51 = sadd.s32 %s50, 1
      %p54 = scmp.eq.s32.totalorder %s16, 1
      %p55 = scmp.ne.s32.totalorder %s50, %s52
      %p56 = scmp.eq.s32.totalorder %s16, 0
      %p57 = por %p55, %p56
      %p58 = scmp.ne.s32.totalorder %s50, %s52
      %p59 = scmp.eq.s32.totalorder %s21, 1
      %p60 = por %p58, %p59
      %p61 = scmp.ne.s32.totalorder %s52, %s53
      %p62 = scmp.eq.s32.totalorder %s21, 0
      %p63 = por %p61, %p62
      %p64 = scmp.ne.s32.totalorder %s52, %s53
      %p65 = scmp.eq.s32.totalorder %s22, 1
      %p66 = por %p64, %p65
      %p68 = scmp.ne.s32.totalorder %s53, %s67
      %p69 = scmp.eq.s32.totalorder %s22, 0
      %p70 = por %p68, %p69
      %s71 = ssub.s32 %s16, %s23
      %p72 = scmp.eq.s32.totalorder %s71, 0
      %s74 = sadd.s32 %s73, 1
      %s75 = scalar_select %p72, %s73, %s74
      %p78 = pneg %p72
      %p79 = scmp.eq.s32.totalorder %s16, 1
      %p80 = por %p78, %p79
      %p81 = scmp.ne.s32.totalorder %s73, %s76
      %p82 = scmp.eq.s32.totalorder %s16, 0
      %p83 = por %p81, %p82
      %p84 = scmp.ne.s32.totalorder %s73, %s76
      %p85 = scmp.eq.s32.totalorder %s21, 1
      %p86 = por %p84, %p85
      %p87 = scmp.ne.s32.totalorder %s76, %s77
      %p88 = scmp.eq.s32.totalorder %s21, 0
      %p89 = por %p87, %p88
      %p90 = scmp.ne.s32.totalorder %s76, %s77
      %p91 = scmp.eq.s32.totalorder %s22, 1
      %p92 = por %p90, %p91
      %p94 = scmp.ne.s32.totalorder %s77, %s93
      %p95 = scmp.eq.s32.totalorder %s22, 0
      %p96 = por %p94, %p95
      %s97 = ssub.s32 %s16, %s23
      %p98 = scmp.eq.s32.totalorder %s97, 0
      %s100 = sadd.s32 %s99, 1
      %s101 = scalar_select %p98, %s99, %s100
      %p104 = pneg %p98
      %p105 = scmp.eq.s32.totalorder %s16, 1
      %p106 = por %p104, %p105
      %p107 = scmp.ne.s32.totalorder %s99, %s102
      %p108 = scmp.eq.s32.totalorder %s16, 0
      %p109 = por %p107, %p108
      %p110 = scmp.ne.s32.totalorder %s99, %s102
      %p111 = scmp.eq.s32.totalorder %s21, 1
      %p112 = por %p110, %p111
      %p113 = scmp.ne.s32.totalorder %s102, %s103
      %p114 = scmp.eq.s32.totalorder %s21, 0
      %p115 = por %p113, %p114
      %p116 = scmp.ne.s32.totalorder %s102, %s103
      %p117 = scmp.eq.s32.totalorder %s22, 1
      %p118 = por %p116, %p117
      %p120 = scmp.ne.s32.totalorder %s103, %s119
      %p121 = scmp.eq.s32.totalorder %s22, 0
      %p122 = por %p120, %p121
      %p123 = scmp.le.s32.totalorder 1, %s16
      %p124 = scmp.lt.s32.totalorder %s16, 3
      %p125 = pnand %p123, %p124
      %p126 = pneg %p125
      // Predicated region
      $region9: #{tpu_custom_call.1} parent=5 // pred_check
        _
      $region10: #{tpu_custom_call.1} parent=5 // pred_check_branch
        %128 = sbr.rel (%p125) target = $region12
      $region11: #{tpu_custom_call.1} parent=5 // pred_region
        %s129 = ssub.s32 %s16, 1
        // Predicated region
        $region13: #{tpu_custom_call.1} parent=11 // pred_check
          %p130 = pneg %p63
        $region14: #{tpu_custom_call.1} parent=11 // pred_check_branch
          %132 = sbr.rel (%p130) target = $region16
        $region15: #{tpu_custom_call.1} parent=11 // pred_region
          %s134 = ssub.s32 64, 64
          %135 = vsyncadd [#allocation8], %s134
          %s137 = sshll.u32 [#allocation7], 4
          %s138 = int_to_ptr.vmem [resolvable:$true] %s137
          %140 = dma.hbm_to_vmem [thread:$0]  %s1, 64, %s138, [#allocation8]
        $region16: #{tpu_custom_call.1} parent=11 // pred_fallthru
          _
      $region12: #{tpu_custom_call.1} parent=5 // pred_fallthru
        _
      %p141 = scmp.lt.s32.totalorder %s16, 2
      // Predicated region
      $region17: #{tpu_custom_call.1} parent=5 // pred_check
        %p142 = pneg %p141
      $region18: #{tpu_custom_call.1} parent=5 // pred_check_branch
        %144 = sbr.rel (%p142) target = $region20
      $region19: #{tpu_custom_call.1} parent=5 // pred_region
        // Predicated region
        $region21: #{tpu_custom_call.1} parent=19 // pred_check
          %p145 = pneg %p36
        $region22: #{tpu_custom_call.1} parent=19 // pred_check_branch
          %147 = sbr.rel (%p145) target = $region24
        $region23: #{tpu_custom_call.1} parent=19 // pred_region
          %s148 = sand.u32 %s16, 1
          %s149 = scalar_lea.sflag [#allocation5], %s148
          %s150 = sand.u32 %s26, 1
          %s151 = smul.addr %s150, 4
          %s152 = scalar_lea.vmem [#allocation4], %s151
          %s154 = ssub.s32 64, 64
          %155 = vsyncadd %s149, %s154
          %s156 = smul.addr %s16, 2
          %s157 = smul.addr %s156, 32
          %s158 = scalar_lea.hbm %s0, %s157
          %s160 = sshll.u32 %s152, 4
          %s161 = int_to_ptr.vmem [resolvable:$true] %s160
          %163 = dma.hbm_to_vmem [thread:$0]  %s158, 64, %s161, %s149
        $region24: #{tpu_custom_call.1} parent=19 // pred_fallthru
          _
        // Predicated region
        $region25: #{tpu_custom_call.1} parent=19 // pred_check
          %p164 = pneg %p83
        $region26: #{tpu_custom_call.1} parent=19 // pred_check_branch
          %166 = sbr.rel (%p164) target = $region28
        $region27: #{tpu_custom_call.1} parent=19 // pred_region
          %s167 = sand.u32 %s16, 1
          %s168 = scalar_lea.sflag [#allocation5], %s167
          %s169 = sand.u32 %s73, 1
          %s170 = smul.addr %s169, 8
          %s171 = scalar_lea.vmem [#allocation9], %s170
          %s173 = ssub.s32 128, 128
          %174 = vsyncadd %s168, %s173
          %s175 = smul.addr %s16, 2
          %s176 = smul.addr %s175, 64
          %s177 = scalar_lea.hbm %s2, %s176
          %s179 = sshll.u32 %s171, 4
          %s180 = int_to_ptr.vmem [resolvable:$true] %s179
          %182 = dma.hbm_to_vmem [thread:$0]  %s177, 128, %s180, %s168
        $region28: #{tpu_custom_call.1} parent=19 // pred_fallthru
          _
      $region20: #{tpu_custom_call.1} parent=5 // pred_fallthru
        _
      %p183 = scmp.le.s32.totalorder 1, %s16
      %p184 = scmp.lt.s32.totalorder %s16, 3
      %p185 = pnand %p183, %p184
      %p186 = pneg %p185
      // Predicated region
      $region29: #{tpu_custom_call.1} parent=5 // pred_check
        _
      $region30: #{tpu_custom_call.1} parent=5 // pred_check_branch
        %188 = sbr.rel (%p185) target = $region32
      $region31: #{tpu_custom_call.1} parent=5 // pred_region
        %s189 = ssub.s32 %s16, 1
        %s190 = sand.u32 %s21, 1
        %s191 = scalar_lea.sflag [#allocation5], %s190
        %s192 = sand.u32 %s29, 1
        %s193 = smul.addr %s192, 4
        %s194 = scalar_lea.vmem [#allocation4], %s193
        // Predicated region
        $region33: #{tpu_custom_call.1} parent=31 // pred_check
          %p195 = pneg %p42
        $region34: #{tpu_custom_call.1} parent=31 // pred_check_branch
          %197 = sbr.rel (%p195) target = $region36
        $region35: #{tpu_custom_call.1} parent=31 // pred_region
          %198 = dma.done %s191, 64
        $region36: #{tpu_custom_call.1} parent=31 // pred_fallthru
          _
        // Predicated region
        $region37: #{tpu_custom_call.1} parent=31 // pred_check
          %p199 = pneg %p63
        $region38: #{tpu_custom_call.1} parent=31 // pred_check_branch
          %201 = sbr.rel (%p199) target = $region40
        $region39: #{tpu_custom_call.1} parent=31 // pred_region
          %202 = dma.done [#allocation8], 64
        $region40: #{tpu_custom_call.1} parent=31 // pred_fallthru
          _
        %s203 = sand.u32 %s21, 1
        %s204 = scalar_lea.sflag [#allocation5], %s203
        %s205 = sand.u32 %s76, 1
        %s206 = smul.addr %s205, 8
        %s207 = scalar_lea.vmem [#allocation9], %s206
        // Predicated region
        $region41: #{tpu_custom_call.1} parent=31 // pred_check
          %p208 = pneg %p89
        $region42: #{tpu_custom_call.1} parent=31 // pred_check_branch
          %210 = sbr.rel (%p208) target = $region44
        $region43: #{tpu_custom_call.1} parent=31 // pred_region
          %211 = dma.done %s204, 128
        $region44: #{tpu_custom_call.1} parent=31 // pred_fallthru
          _
        %s212 = sand.u32 %s21, 1
        %s213 = scalar_lea.sflag [#allocation5], %s212
        %s214 = sand.u32 %s29, 1
        %s215 = smul.addr %s214, 4
        %s216 = scalar_lea.vmem [#allocation4], %s215
        %p217 = pneg %p42
        %p218 = pneg %p39
        %p219 = pneg %p63
        %p220 = pneg %p60
        %s221 = sand.u32 %s21, 1
        %s222 = scalar_lea.sflag [#allocation5], %s221
        %s223 = sand.u32 %s76, 1
        %s224 = smul.addr %s223, 8
        %s225 = scalar_lea.vmem [#allocation9], %s224
        %p226 = pneg %p89
        %p227 = pneg %p86
        %p228 = pneg %p115
        %p229 = pneg %p112
        %s230 = sand.u32 %s102, 1
        %s231 = scalar_lea.sflag [#allocation6], %s230
        %s232 = sand.u32 %s102, 1
        %s233 = smul.addr %s232, 8
        %s234 = scalar_lea.vmem [#allocation10], %s233
        %v235 = vlaneseq
        %v236 = vshrl.u32 %v235, 7
        %v237 = vadd.s32 %v236, 8
        %v238 = vadd.s32 %v236, 16
        %v239 = vadd.s32 %v236, 24
        %v240 = vadd.s32 %v236, 32
        %v241 = vadd.s32 %v236, 40
        %v242 = vadd.s32 %v236, 48
        %v243 = vadd.s32 %v236, 56
        %v244 = vadd.s32 %v236, 64
        %v245 = vadd.s32 %v236, 72
        %v246 = vadd.s32 %v236, 80
        %v247 = vadd.s32 %v236, 88
        %v248 = vadd.s32 %v236, 96
        %v249 = vadd.s32 %v236, 104
        %v250 = vadd.s32 %v236, 112
        %v251 = vadd.s32 %v236, 120
        %v252 = vadd.s32 %v236, 128
        %v253 = vadd.s32 %v236, 136
        %v254 = vadd.s32 %v236, 144
        %v255 = vadd.s32 %v236, 152
        %v256 = vadd.s32 %v236, 160
        %v257 = vadd.s32 %v236, 168
        %v258 = vadd.s32 %v236, 176
        %v259 = vadd.s32 %v236, 184
        %v260 = vadd.s32 %v236, 192
        %v261 = vadd.s32 %v236, 200
        %v262 = vadd.s32 %v236, 208
        %v263 = vadd.s32 %v236, 216
        %v264 = vadd.s32 %v236, 224
        %v265 = vadd.s32 %v236, 232
        %v266 = vadd.s32 %v236, 240
        %v267 = vadd.s32 %v236, 248
        %v268 = vld [vmem:[%s194] sm:$0xf]
        %v269 = vmul.f32 %v268, 0.0009765625
        %v272 = vunpack.c.l.s4 1966171168
        %v273 = vunpack.c.0.s8 %v272
        %v274 = vlaneseq
        %v275 = vshrl.u32 %v274, 7
        %v276 = vsub.s32 %v273, %v275
        %v277 = vrot.slane %v269, %v276
        %v279 = vlaneseq
        %vm280 = vcmp.ge.s32.totalorder %v279, 0
        %vm281 = vcmp.lt.s32.totalorder %v279, 256
        %vm282 = vmand %vm280, %vm281
        %283 = vst.msk [vmem:[#allocation2] ss:$2 sm:$0x3] %vm282, %v277
        %v284 = vcombine.high %v277, %v277
        %s286 = scalar_lea.vmem [#allocation2], 1
        %287 = vst.msk [vmem:[%s286] ss:$2 sm:$0x3] %vm282, %v284
        loop: start=0, step=1, limit=7
        $region45: #{tpu_custom_call.1} parent=31 // loop_pre_header
          _
        $region46: #{tpu_custom_call.1} parent=31 // loop_header
          %s289 = sphi 0, %s293
          %p290 = scmp.ge.s32.totalorder %s289, 7
        $region47: #{tpu_custom_call.1} parent=31 // loop_header_branch
          %292 = sbr.rel (%p290) target = $region51
        $region48: #{tpu_custom_call.1} parent=31 // loop_body
          %v294 = vld [vmem:[#allocation2] sm:$0xf]
          %v295 = vld [vmem:[#allocation7] sm:$0xf]
          %v296 = vadd.f32 %v294, %v295
          %v297 = vadd.f32 %v296, 1.0
          %v298 = vmul.f32 %v297, 16.0
          %v299 = vsub.f32 %v298, 1.0
          %v300 = vmul.f32 %v299, 0.5
          %v301 = vmax.f32 %v300, 0.0
          %v302 = vmin.f32 %v301, 15.0
          %v303 = vfloor.f32 %v302
          %v304 = vsub.f32 %v302, %v303
          %v305 = vsub.f32 1.0, %v304
          %v306 = vcvt.f32.s32.to.zero.pseudo %v303
          %vm307 = vcmp.gt.s32.totalorder %v306, 0
          %v308 = vsel %vm307, %v306, 0
          %vm309 = vcmp.lt.s32.totalorder %v308, 15
          %v310 = vsel %vm309, %v308, 15
          %v311 = vadd.s32 %v310, 1
          %vm312 = vcmp.lt.s32.totalorder %v311, 15
          %v313 = vsel %vm312, %v311, 15
          %v314 = vmul.u32 %v310, 16
          %v315 = vrot.slane %v310, 7
          %v316 = vadd.s32 %v314, %v315
          %v317 = vrot.slane %v313, 7
          %v318 = vadd.s32 %v314, %v317
          %v319 = vmul.u32 %v313, 16
          %v320 = vadd.s32 %v319, %v315
          %v321 = vadd.s32 %v319, %v317
          %v323 = vrot.slane %v305, 7
          %v325 = vmul.f32 %v305, %v323
          %v327 = vrot.slane %v304, 7
          %v329 = vmul.f32 %v305, %v327
          %v330 = vmul.f32 %v304, %v323
          %v331 = vmul.f32 %v304, %v327
          %v332 = vlaneseq
          %v333 = vshrl.u32 %v332, 7
          %v334 = vsub.s32 1, %v333
          %v335 = vrot.slane %v316, %v334
          %v336 = vlaneseq
          %v337 = vshrl.u32 %v336, 7
          %v338 = vsub.s32 3, %v337
          %v339 = vrot.slane %v316, %v338
          %v340 = vlaneseq
          %v341 = vshrl.u32 %v340, 7
          %v342 = vsub.s32 1, %v341
          %v343 = vrot.slane %v335, %v342
          %v344 = vlaneseq
          %v345 = vshrl.u32 %v344, 7
          %v346 = vsub.s32 1, %v345
          %v347 = vrot.slane %v339, %v346
          %vm348 = vcmp.eq.s32.totalorder %v236, %v343
          %vm349 = vcmp.eq.s32.totalorder %v236, %v347
          %vm350 = vcmp.eq.s32.totalorder %v237, %v343
          %vm351 = vcmp.eq.s32.totalorder %v237, %v347
          %vm352 = vcmp.eq.s32.totalorder %v238, %v343
          %vm353 = vcmp.eq.s32.totalorder %v238, %v347
          %vm354 = vcmp.eq.s32.totalorder %v239, %v343
          %vm355 = vcmp.eq.s32.totalorder %v239, %v347
          %vm356 = vcmp.eq.s32.totalorder %v240, %v343
          %vm357 = vcmp.eq.s32.totalorder %v240, %v347
          %vm358 = vcmp.eq.s32.totalorder %v241, %v343
          %vm359 = vcmp.eq.s32.totalorder %v241, %v347
          %vm360 = vcmp.eq.s32.totalorder %v242, %v343
          %vm361 = vcmp.eq.s32.totalorder %v242, %v347
          %vm362 = vcmp.eq.s32.totalorder %v243, %v343
          %vm363 = vcmp.eq.s32.totalorder %v243, %v347
          %vm364 = vcmp.eq.s32.totalorder %v244, %v343
          %vm365 = vcmp.eq.s32.totalorder %v244, %v347
          %vm366 = vcmp.eq.s32.totalorder %v245, %v343
          %vm367 = vcmp.eq.s32.totalorder %v245, %v347
          %vm368 = vcmp.eq.s32.totalorder %v246, %v343
          %vm369 = vcmp.eq.s32.totalorder %v246, %v347
          %vm370 = vcmp.eq.s32.totalorder %v247, %v343
          %vm371 = vcmp.eq.s32.totalorder %v247, %v347
          %vm372 = vcmp.eq.s32.totalorder %v248, %v343
          %vm373 = vcmp.eq.s32.totalorder %v248, %v347
          %vm374 = vcmp.eq.s32.totalorder %v249, %v343
          %vm375 = vcmp.eq.s32.totalorder %v249, %v347
          %vm376 = vcmp.eq.s32.totalorder %v250, %v343
          %vm377 = vcmp.eq.s32.totalorder %v250, %v347
          %vm378 = vcmp.eq.s32.totalorder %v251, %v343
          %vm379 = vcmp.eq.s32.totalorder %v251, %v347
          %vm380 = vcmp.eq.s32.totalorder %v252, %v343
          %vm381 = vcmp.eq.s32.totalorder %v252, %v347
          %vm382 = vcmp.eq.s32.totalorder %v253, %v343
          %vm383 = vcmp.eq.s32.totalorder %v253, %v347
          %vm384 = vcmp.eq.s32.totalorder %v254, %v343
          %vm385 = vcmp.eq.s32.totalorder %v254, %v347
          %vm386 = vcmp.eq.s32.totalorder %v255, %v343
          %vm387 = vcmp.eq.s32.totalorder %v255, %v347
          %vm388 = vcmp.eq.s32.totalorder %v256, %v343
          %vm389 = vcmp.eq.s32.totalorder %v256, %v347
          %vm390 = vcmp.eq.s32.totalorder %v257, %v343
          %vm391 = vcmp.eq.s32.totalorder %v257, %v347
          %vm392 = vcmp.eq.s32.totalorder %v258, %v343
          %vm393 = vcmp.eq.s32.totalorder %v258, %v347
          %vm394 = vcmp.eq.s32.totalorder %v259, %v343
          %vm395 = vcmp.eq.s32.totalorder %v259, %v347
          %vm396 = vcmp.eq.s32.totalorder %v260, %v343
          %vm397 = vcmp.eq.s32.totalorder %v260, %v347
          %vm398 = vcmp.eq.s32.totalorder %v261, %v343
          %vm399 = vcmp.eq.s32.totalorder %v261, %v347
          %vm400 = vcmp.eq.s32.totalorder %v262, %v343
          %vm401 = vcmp.eq.s32.totalorder %v262, %v347
          %vm402 = vcmp.eq.s32.totalorder %v263, %v343
          %vm403 = vcmp.eq.s32.totalorder %v263, %v347
          %vm404 = vcmp.eq.s32.totalorder %v264, %v343
          %vm405 = vcmp.eq.s32.totalorder %v264, %v347
          %vm406 = vcmp.eq.s32.totalorder %v265, %v343
          %vm407 = vcmp.eq.s32.totalorder %v265, %v347
          %vm408 = vcmp.eq.s32.totalorder %v266, %v343
          %vm409 = vcmp.eq.s32.totalorder %v266, %v347
          %vm410 = vcmp.eq.s32.totalorder %v267, %v343
          %vm411 = vcmp.eq.s32.totalorder %v267, %v347
          %v413 = vlaneseq
          %v414 = vshrl.u32 %v413, 7
          %v415 = vsub.s32 1, %v414
          %v416 = vrot.slane %v325, %v415
          %v417 = vlaneseq
          %v418 = vshrl.u32 %v417, 7
          %v419 = vsub.s32 3, %v418
          %v420 = vrot.slane %v325, %v419
          %v423 = vlaneseq
          %v424 = vshrl.u32 %v423, 7
          %v425 = vsub.s32 1, %v424
          %v426 = vrot.slane %v416, %v425
          %v427 = vlaneseq
          %v428 = vshrl.u32 %v427, 7
          %v429 = vsub.s32 1, %v428
          %v430 = vrot.slane %v420, %v429
          %v431 = vsel %vm348, %v426, 0.0
          %v432 = vsel %vm349, %v430, 0.0
          %v433 = vsel %vm350, %v426, 0.0
          %v434 = vsel %vm351, %v430, 0.0
          %v435 = vsel %vm352, %v426, 0.0
          %v436 = vsel %vm353, %v430, 0.0
          %v437 = vsel %vm354, %v426, 0.0
          %v438 = vsel %vm355, %v430, 0.0
          %v439 = vsel %vm356, %v426, 0.0
          %v440 = vsel %vm357, %v430, 0.0
          %v441 = vsel %vm358, %v426, 0.0
          %v442 = vsel %vm359, %v430, 0.0
          %v443 = vsel %vm360, %v426, 0.0
          %v444 = vsel %vm361, %v430, 0.0
          %v445 = vsel %vm362, %v426, 0.0
          %v446 = vsel %vm363, %v430, 0.0
          %v447 = vsel %vm364, %v426, 0.0
          %v448 = vsel %vm365, %v430, 0.0
          %v449 = vsel %vm366, %v426, 0.0
          %v450 = vsel %vm367, %v430, 0.0
          %v451 = vsel %vm368, %v426, 0.0
          %v452 = vsel %vm369, %v430, 0.0
          %v453 = vsel %vm370, %v426, 0.0
          %v454 = vsel %vm371, %v430, 0.0
          %v455 = vsel %vm372, %v426, 0.0
          %v456 = vsel %vm373, %v430, 0.0
          %v457 = vsel %vm374, %v426, 0.0
          %v458 = vsel %vm375, %v430, 0.0
          %v459 = vsel %vm376, %v426, 0.0
          %v460 = vsel %vm377, %v430, 0.0
          %v461 = vsel %vm378, %v426, 0.0
          %v462 = vsel %vm379, %v430, 0.0
          %v463 = vsel %vm380, %v426, 0.0
          %v464 = vsel %vm381, %v430, 0.0
          %v465 = vsel %vm382, %v426, 0.0
          %v466 = vsel %vm383, %v430, 0.0
          %v467 = vsel %vm384, %v426, 0.0
          %v468 = vsel %vm385, %v430, 0.0
          %v469 = vsel %vm386, %v426, 0.0
          %v470 = vsel %vm387, %v430, 0.0
          %v471 = vsel %vm388, %v426, 0.0
          %v472 = vsel %vm389, %v430, 0.0
          %v473 = vsel %vm390, %v426, 0.0
          %v474 = vsel %vm391, %v430, 0.0
          %v475 = vsel %vm392, %v426, 0.0
          %v476 = vsel %vm393, %v430, 0.0
          %v477 = vsel %vm394, %v426, 0.0
          %v478 = vsel %vm395, %v430, 0.0
          %v479 = vsel %vm396, %v426, 0.0
          %v480 = vsel %vm397, %v430, 0.0
          %v481 = vsel %vm398, %v426, 0.0
          %v482 = vsel %vm399, %v430, 0.0
          %v483 = vsel %vm400, %v426, 0.0
          %v484 = vsel %vm401, %v430, 0.0
          %v485 = vsel %vm402, %v426, 0.0
          %v486 = vsel %vm403, %v430, 0.0
          %v487 = vsel %vm404, %v426, 0.0
          %v488 = vsel %vm405, %v430, 0.0
          %v489 = vsel %vm406, %v426, 0.0
          %v490 = vsel %vm407, %v430, 0.0
          %v491 = vsel %vm408, %v426, 0.0
          %v492 = vsel %vm409, %v430, 0.0
          %v493 = vsel %vm410, %v426, 0.0
          %v494 = vsel %vm411, %v430, 0.0
          %v495 = vlaneseq
          %v496 = vshrl.u32 %v495, 7
          %v497 = vsub.s32 1, %v496
          %v498 = vrot.slane %v318, %v497
          %v499 = vlaneseq
          %v500 = vshrl.u32 %v499, 7
          %v501 = vsub.s32 3, %v500
          %v502 = vrot.slane %v318, %v501
          %v503 = vlaneseq
          %v504 = vshrl.u32 %v503, 7
          %v505 = vsub.s32 1, %v504
          %v506 = vrot.slane %v498, %v505
          %v507 = vlaneseq
          %v508 = vshrl.u32 %v507, 7
          %v509 = vsub.s32 1, %v508
          %v510 = vrot.slane %v502, %v509
          %vm511 = vcmp.eq.s32.totalorder %v236, %v506
          %vm512 = vcmp.eq.s32.totalorder %v236, %v510
          %vm513 = vcmp.eq.s32.totalorder %v237, %v506
          %vm514 = vcmp.eq.s32.totalorder %v237, %v510
          %vm515 = vcmp.eq.s32.totalorder %v238, %v506
          %vm516 = vcmp.eq.s32.totalorder %v238, %v510
          %vm517 = vcmp.eq.s32.totalorder %v239, %v506
          %vm518 = vcmp.eq.s32.totalorder %v239, %v510
          %vm519 = vcmp.eq.s32.totalorder %v240, %v506
          %vm520 = vcmp.eq.s32.totalorder %v240, %v510
          %vm521 = vcmp.eq.s32.totalorder %v241, %v506
          %vm522 = vcmp.eq.s32.totalorder %v241, %v510
          %vm523 = vcmp.eq.s32.totalorder %v242, %v506
          %vm524 = vcmp.eq.s32.totalorder %v242, %v510
          %vm525 = vcmp.eq.s32.totalorder %v243, %v506
          %vm526 = vcmp.eq.s32.totalorder %v243, %v510
          %vm527 = vcmp.eq.s32.totalorder %v244, %v506
          %vm528 = vcmp.eq.s32.totalorder %v244, %v510
          %vm529 = vcmp.eq.s32.totalorder %v245, %v506
          %vm530 = vcmp.eq.s32.totalorder %v245, %v510
          %vm531 = vcmp.eq.s32.totalorder %v246, %v506
          %vm532 = vcmp.eq.s32.totalorder %v246, %v510
          %vm533 = vcmp.eq.s32.totalorder %v247, %v506
          %vm534 = vcmp.eq.s32.totalorder %v247, %v510
          %vm535 = vcmp.eq.s32.totalorder %v248, %v506
          %vm536 = vcmp.eq.s32.totalorder %v248, %v510
          %vm537 = vcmp.eq.s32.totalorder %v249, %v506
          %vm538 = vcmp.eq.s32.totalorder %v249, %v510
          %vm539 = vcmp.eq.s32.totalorder %v250, %v506
          %vm540 = vcmp.eq.s32.totalorder %v250, %v510
          %vm541 = vcmp.eq.s32.totalorder %v251, %v506
          %vm542 = vcmp.eq.s32.totalorder %v251, %v510
          %vm543 = vcmp.eq.s32.totalorder %v252, %v506
          %vm544 = vcmp.eq.s32.totalorder %v252, %v510
          %vm545 = vcmp.eq.s32.totalorder %v253, %v506
          %vm546 = vcmp.eq.s32.totalorder %v253, %v510
          %vm547 = vcmp.eq.s32.totalorder %v254, %v506
          %vm548 = vcmp.eq.s32.totalorder %v254, %v510
          %vm549 = vcmp.eq.s32.totalorder %v255, %v506
          %vm550 = vcmp.eq.s32.totalorder %v255, %v510
          %vm551 = vcmp.eq.s32.totalorder %v256, %v506
          %vm552 = vcmp.eq.s32.totalorder %v256, %v510
          %vm553 = vcmp.eq.s32.totalorder %v257, %v506
          %vm554 = vcmp.eq.s32.totalorder %v257, %v510
          %vm555 = vcmp.eq.s32.totalorder %v258, %v506
          %vm556 = vcmp.eq.s32.totalorder %v258, %v510
          %vm557 = vcmp.eq.s32.totalorder %v259, %v506
          %vm558 = vcmp.eq.s32.totalorder %v259, %v510
          %vm559 = vcmp.eq.s32.totalorder %v260, %v506
          %vm560 = vcmp.eq.s32.totalorder %v260, %v510
          %vm561 = vcmp.eq.s32.totalorder %v261, %v506
          %vm562 = vcmp.eq.s32.totalorder %v261, %v510
          %vm563 = vcmp.eq.s32.totalorder %v262, %v506
          %vm564 = vcmp.eq.s32.totalorder %v262, %v510
          %vm565 = vcmp.eq.s32.totalorder %v263, %v506
          %vm566 = vcmp.eq.s32.totalorder %v263, %v510
          %vm567 = vcmp.eq.s32.totalorder %v264, %v506
          %vm568 = vcmp.eq.s32.totalorder %v264, %v510
          %vm569 = vcmp.eq.s32.totalorder %v265, %v506
          %vm570 = vcmp.eq.s32.totalorder %v265, %v510
          %vm571 = vcmp.eq.s32.totalorder %v266, %v506
          %vm572 = vcmp.eq.s32.totalorder %v266, %v510
          %vm573 = vcmp.eq.s32.totalorder %v267, %v506
          %vm574 = vcmp.eq.s32.totalorder %v267, %v510
          %v576 = vlaneseq
          %v577 = vshrl.u32 %v576, 7
          %v578 = vsub.s32 1, %v577
          %v579 = vrot.slane %v329, %v578
          %v580 = vlaneseq
          %v581 = vshrl.u32 %v580, 7
          %v582 = vsub.s32 3, %v581
          %v583 = vrot.slane %v329, %v582
          %v586 = vlaneseq
          %v587 = vshrl.u32 %v586, 7
          %v588 = vsub.s32 1, %v587
          %v589 = vrot.slane %v579, %v588
          %v590 = vlaneseq
          %v591 = vshrl.u32 %v590, 7
          %v592 = vsub.s32 1, %v591
          %v593 = vrot.slane %v583, %v592
          %v594 = vsel %vm511, %v589, 0.0
          %v595 = vsel %vm512, %v593, 0.0
          %v596 = vsel %vm513, %v589, 0.0
          %v597 = vsel %vm514, %v593, 0.0
          %v598 = vsel %vm515, %v589, 0.0
          %v599 = vsel %vm516, %v593, 0.0
          %v600 = vsel %vm517, %v589, 0.0
          %v601 = vsel %vm518, %v593, 0.0
          %v602 = vsel %vm519, %v589, 0.0
          %v603 = vsel %vm520, %v593, 0.0
          %v604 = vsel %vm521, %v589, 0.0
          %v605 = vsel %vm522, %v593, 0.0
          %v606 = vsel %vm523, %v589, 0.0
          %v607 = vsel %vm524, %v593, 0.0
          %v608 = vsel %vm525, %v589, 0.0
          %v609 = vsel %vm526, %v593, 0.0
          %v610 = vsel %vm527, %v589, 0.0
          %v611 = vsel %vm528, %v593, 0.0
          %v612 = vsel %vm529, %v589, 0.0
          %v613 = vsel %vm530, %v593, 0.0
          %v614 = vsel %vm531, %v589, 0.0
          %v615 = vsel %vm532, %v593, 0.0
          %v616 = vsel %vm533, %v589, 0.0
          %v617 = vsel %vm534, %v593, 0.0
          %v618 = vsel %vm535, %v589, 0.0
          %v619 = vsel %vm536, %v593, 0.0
          %v620 = vsel %vm537, %v589, 0.0
          %v621 = vsel %vm538, %v593, 0.0
          %v622 = vsel %vm539, %v589, 0.0
          %v623 = vsel %vm540, %v593, 0.0
          %v624 = vsel %vm541, %v589, 0.0
          %v625 = vsel %vm542, %v593, 0.0
          %v626 = vsel %vm543, %v589, 0.0
          %v627 = vsel %vm544, %v593, 0.0
          %v628 = vsel %vm545, %v589, 0.0
          %v629 = vsel %vm546, %v593, 0.0
          %v630 = vsel %vm547, %v589, 0.0
          %v631 = vsel %vm548, %v593, 0.0
          %v632 = vsel %vm549, %v589, 0.0
          %v633 = vsel %vm550, %v593, 0.0
          %v634 = vsel %vm551, %v589, 0.0
          %v635 = vsel %vm552, %v593, 0.0
          %v636 = vsel %vm553, %v589, 0.0
          %v637 = vsel %vm554, %v593, 0.0
          %v638 = vsel %vm555, %v589, 0.0
          %v639 = vsel %vm556, %v593, 0.0
          %v640 = vsel %vm557, %v589, 0.0
          %v641 = vsel %vm558, %v593, 0.0
          %v642 = vsel %vm559, %v589, 0.0
          %v643 = vsel %vm560, %v593, 0.0
          %v644 = vsel %vm561, %v589, 0.0
          %v645 = vsel %vm562, %v593, 0.0
          %v646 = vsel %vm563, %v589, 0.0
          %v647 = vsel %vm564, %v593, 0.0
          %v648 = vsel %vm565, %v589, 0.0
          %v649 = vsel %vm566, %v593, 0.0
          %v650 = vsel %vm567, %v589, 0.0
          %v651 = vsel %vm568, %v593, 0.0
          %v652 = vsel %vm569, %v589, 0.0
          %v653 = vsel %vm570, %v593, 0.0
          %v654 = vsel %vm571, %v589, 0.0
          %v655 = vsel %vm572, %v593, 0.0
          %v656 = vsel %vm573, %v589, 0.0
          %v657 = vsel %vm574, %v593, 0.0
          %v658 = vadd.f32 %v431, %v594
          %v659 = vadd.f32 %v432, %v595
          %v660 = vadd.f32 %v433, %v596
          %v661 = vadd.f32 %v434, %v597
          %v662 = vadd.f32 %v435, %v598
          %v663 = vadd.f32 %v436, %v599
          %v664 = vadd.f32 %v437, %v600
          %v665 = vadd.f32 %v438, %v601
          %v666 = vadd.f32 %v439, %v602
          %v667 = vadd.f32 %v440, %v603
          %v668 = vadd.f32 %v441, %v604
          %v669 = vadd.f32 %v442, %v605
          %v670 = vadd.f32 %v443, %v606
          %v671 = vadd.f32 %v444, %v607
          %v672 = vadd.f32 %v445, %v608
          %v673 = vadd.f32 %v446, %v609
          %v674 = vadd.f32 %v447, %v610
          %v675 = vadd.f32 %v448, %v611
          %v676 = vadd.f32 %v449, %v612
          %v677 = vadd.f32 %v450, %v613
          %v678 = vadd.f32 %v451, %v614
          %v679 = vadd.f32 %v452, %v615
          %v680 = vadd.f32 %v453, %v616
          %v681 = vadd.f32 %v454, %v617
          %v682 = vadd.f32 %v455, %v618
          %v683 = vadd.f32 %v456, %v619
          %v684 = vadd.f32 %v457, %v620
          %v685 = vadd.f32 %v458, %v621
          %v686 = vadd.f32 %v459, %v622
          %v687 = vadd.f32 %v460, %v623
          %v688 = vadd.f32 %v461, %v624
          %v689 = vadd.f32 %v462, %v625
          %v690 = vadd.f32 %v463, %v626
          %v691 = vadd.f32 %v464, %v627
          %v692 = vadd.f32 %v465, %v628
          %v693 = vadd.f32 %v466, %v629
          %v694 = vadd.f32 %v467, %v630
          %v695 = vadd.f32 %v468, %v631
          %v696 = vadd.f32 %v469, %v632
          %v697 = vadd.f32 %v470, %v633
          %v698 = vadd.f32 %v471, %v634
          %v699 = vadd.f32 %v472, %v635
          %v700 = vadd.f32 %v473, %v636
          %v701 = vadd.f32 %v474, %v637
          %v702 = vadd.f32 %v475, %v638
          %v703 = vadd.f32 %v476, %v639
          %v704 = vadd.f32 %v477, %v640
          %v705 = vadd.f32 %v478, %v641
          %v706 = vadd.f32 %v479, %v642
          %v707 = vadd.f32 %v480, %v643
          %v708 = vadd.f32 %v481, %v644
          %v709 = vadd.f32 %v482, %v645
          %v710 = vadd.f32 %v483, %v646
          %v711 = vadd.f32 %v484, %v647
          %v712 = vadd.f32 %v485, %v648
          %v713 = vadd.f32 %v486, %v649
          %v714 = vadd.f32 %v487, %v650
          %v715 = vadd.f32 %v488, %v651
          %v716 = vadd.f32 %v489, %v652
          %v717 = vadd.f32 %v490, %v653
          %v718 = vadd.f32 %v491, %v654
          %v719 = vadd.f32 %v492, %v655
          %v720 = vadd.f32 %v493, %v656
          %v721 = vadd.f32 %v494, %v657
          %v722 = vlaneseq
          %v723 = vshrl.u32 %v722, 7
          %v724 = vsub.s32 1, %v723
          %v725 = vrot.slane %v320, %v724
          %v726 = vlaneseq
          %v727 = vshrl.u32 %v726, 7
          %v728 = vsub.s32 3, %v727
          %v729 = vrot.slane %v320, %v728
          %v730 = vlaneseq
          %v731 = vshrl.u32 %v730, 7
          %v732 = vsub.s32 1, %v731
          %v733 = vrot.slane %v725, %v732
          %v734 = vlaneseq
          %v735 = vshrl.u32 %v734, 7
          %v736 = vsub.s32 1, %v735
          %v737 = vrot.slane %v729, %v736
          %vm738 = vcmp.eq.s32.totalorder %v236, %v733
          %vm739 = vcmp.eq.s32.totalorder %v236, %v737
          %vm740 = vcmp.eq.s32.totalorder %v237, %v733
          %vm741 = vcmp.eq.s32.totalorder %v237, %v737
          %vm742 = vcmp.eq.s32.totalorder %v238, %v733
          %vm743 = vcmp.eq.s32.totalorder %v238, %v737
          %vm744 = vcmp.eq.s32.totalorder %v239, %v733
          %vm745 = vcmp.eq.s32.totalorder %v239, %v737
          %vm746 = vcmp.eq.s32.totalorder %v240, %v733
          %vm747 = vcmp.eq.s32.totalorder %v240, %v737
          %vm748 = vcmp.eq.s32.totalorder %v241, %v733
          %vm749 = vcmp.eq.s32.totalorder %v241, %v737
          %vm750 = vcmp.eq.s32.totalorder %v242, %v733
          %vm751 = vcmp.eq.s32.totalorder %v242, %v737
          %vm752 = vcmp.eq.s32.totalorder %v243, %v733
          %vm753 = vcmp.eq.s32.totalorder %v243, %v737
          %vm754 = vcmp.eq.s32.totalorder %v244, %v733
          %vm755 = vcmp.eq.s32.totalorder %v244, %v737
          %vm756 = vcmp.eq.s32.totalorder %v245, %v733
          %vm757 = vcmp.eq.s32.totalorder %v245, %v737
          %vm758 = vcmp.eq.s32.totalorder %v246, %v733
          %vm759 = vcmp.eq.s32.totalorder %v246, %v737
          %vm760 = vcmp.eq.s32.totalorder %v247, %v733
          %vm761 = vcmp.eq.s32.totalorder %v247, %v737
          %vm762 = vcmp.eq.s32.totalorder %v248, %v733
          %vm763 = vcmp.eq.s32.totalorder %v248, %v737
          %vm764 = vcmp.eq.s32.totalorder %v249, %v733
          %vm765 = vcmp.eq.s32.totalorder %v249, %v737
          %vm766 = vcmp.eq.s32.totalorder %v250, %v733
          %vm767 = vcmp.eq.s32.totalorder %v250, %v737
          %vm768 = vcmp.eq.s32.totalorder %v251, %v733
          %vm769 = vcmp.eq.s32.totalorder %v251, %v737
          %vm770 = vcmp.eq.s32.totalorder %v252, %v733
          %vm771 = vcmp.eq.s32.totalorder %v252, %v737
          %vm772 = vcmp.eq.s32.totalorder %v253, %v733
          %vm773 = vcmp.eq.s32.totalorder %v253, %v737
          %vm774 = vcmp.eq.s32.totalorder %v254, %v733
          %vm775 = vcmp.eq.s32.totalorder %v254, %v737
          %vm776 = vcmp.eq.s32.totalorder %v255, %v733
          %vm777 = vcmp.eq.s32.totalorder %v255, %v737
          %vm778 = vcmp.eq.s32.totalorder %v256, %v733
          %vm779 = vcmp.eq.s32.totalorder %v256, %v737
          %vm780 = vcmp.eq.s32.totalorder %v257, %v733
          %vm781 = vcmp.eq.s32.totalorder %v257, %v737
          %vm782 = vcmp.eq.s32.totalorder %v258, %v733
          %vm783 = vcmp.eq.s32.totalorder %v258, %v737
          %vm784 = vcmp.eq.s32.totalorder %v259, %v733
          %vm785 = vcmp.eq.s32.totalorder %v259, %v737
          %vm786 = vcmp.eq.s32.totalorder %v260, %v733
          %vm787 = vcmp.eq.s32.totalorder %v260, %v737
          %vm788 = vcmp.eq.s32.totalorder %v261, %v733
          %vm789 = vcmp.eq.s32.totalorder %v261, %v737
          %vm790 = vcmp.eq.s32.totalorder %v262, %v733
          %vm791 = vcmp.eq.s32.totalorder %v262, %v737
          %vm792 = vcmp.eq.s32.totalorder %v263, %v733
          %vm793 = vcmp.eq.s32.totalorder %v263, %v737
          %vm794 = vcmp.eq.s32.totalorder %v264, %v733
          %vm795 = vcmp.eq.s32.totalorder %v264, %v737
          %vm796 = vcmp.eq.s32.totalorder %v265, %v733
          %vm797 = vcmp.eq.s32.totalorder %v265, %v737
          %vm798 = vcmp.eq.s32.totalorder %v266, %v733
          %vm799 = vcmp.eq.s32.totalorder %v266, %v737
          %vm800 = vcmp.eq.s32.totalorder %v267, %v733
          %vm801 = vcmp.eq.s32.totalorder %v267, %v737
          %v803 = vlaneseq
          %v804 = vshrl.u32 %v803, 7
          %v805 = vsub.s32 1, %v804
          %v806 = vrot.slane %v330, %v805
          %v807 = vlaneseq
          %v808 = vshrl.u32 %v807, 7
          %v809 = vsub.s32 3, %v808
          %v810 = vrot.slane %v330, %v809
          %v813 = vlaneseq
          %v814 = vshrl.u32 %v813, 7
          %v815 = vsub.s32 1, %v814
          %v816 = vrot.slane %v806, %v815
          %v817 = vlaneseq
          %v818 = vshrl.u32 %v817, 7
          %v819 = vsub.s32 1, %v818
          %v820 = vrot.slane %v810, %v819
          %v821 = vsel %vm738, %v816, 0.0
          %v822 = vsel %vm739, %v820, 0.0
          %v823 = vsel %vm740, %v816, 0.0
          %v824 = vsel %vm741, %v820, 0.0
          %v825 = vsel %vm742, %v816, 0.0
          %v826 = vsel %vm743, %v820, 0.0
          %v827 = vsel %vm744, %v816, 0.0
          %v828 = vsel %vm745, %v820, 0.0
          %v829 = vsel %vm746, %v816, 0.0
          %v830 = vsel %vm747, %v820, 0.0
          %v831 = vsel %vm748, %v816, 0.0
          %v832 = vsel %vm749, %v820, 0.0
          %v833 = vsel %vm750, %v816, 0.0
          %v834 = vsel %vm751, %v820, 0.0
          %v835 = vsel %vm752, %v816, 0.0
          %v836 = vsel %vm753, %v820, 0.0
          %v837 = vsel %vm754, %v816, 0.0
          %v838 = vsel %vm755, %v820, 0.0
          %v839 = vsel %vm756, %v816, 0.0
          %v840 = vsel %vm757, %v820, 0.0
          %v841 = vsel %vm758, %v816, 0.0
          %v842 = vsel %vm759, %v820, 0.0
          %v843 = vsel %vm760, %v816, 0.0
          %v844 = vsel %vm761, %v820, 0.0
          %v845 = vsel %vm762, %v816, 0.0
          %v846 = vsel %vm763, %v820, 0.0
          %v847 = vsel %vm764, %v816, 0.0
          %v848 = vsel %vm765, %v820, 0.0
          %v849 = vsel %vm766, %v816, 0.0
          %v850 = vsel %vm767, %v820, 0.0
          %v851 = vsel %vm768, %v816, 0.0
          %v852 = vsel %vm769, %v820, 0.0
          %v853 = vsel %vm770, %v816, 0.0
          %v854 = vsel %vm771, %v820, 0.0
          %v855 = vsel %vm772, %v816, 0.0
          %v856 = vsel %vm773, %v820, 0.0
          %v857 = vsel %vm774, %v816, 0.0
          %v858 = vsel %vm775, %v820, 0.0
          %v859 = vsel %vm776, %v816, 0.0
          %v860 = vsel %vm777, %v820, 0.0
          %v861 = vsel %vm778, %v816, 0.0
          %v862 = vsel %vm779, %v820, 0.0
          %v863 = vsel %vm780, %v816, 0.0
          %v864 = vsel %vm781, %v820, 0.0
          %v865 = vsel %vm782, %v816, 0.0
          %v866 = vsel %vm783, %v820, 0.0
          %v867 = vsel %vm784, %v816, 0.0
          %v868 = vsel %vm785, %v820, 0.0
          %v869 = vsel %vm786, %v816, 0.0
          %v870 = vsel %vm787, %v820, 0.0
          %v871 = vsel %vm788, %v816, 0.0
          %v872 = vsel %vm789, %v820, 0.0
          %v873 = vsel %vm790, %v816, 0.0
          %v874 = vsel %vm791, %v820, 0.0
          %v875 = vsel %vm792, %v816, 0.0
          %v876 = vsel %vm793, %v820, 0.0
          %v877 = vsel %vm794, %v816, 0.0
          %v878 = vsel %vm795, %v820, 0.0
          %v879 = vsel %vm796, %v816, 0.0
          %v880 = vsel %vm797, %v820, 0.0
          %v881 = vsel %vm798, %v816, 0.0
          %v882 = vsel %vm799, %v820, 0.0
          %v883 = vsel %vm800, %v816, 0.0
          %v884 = vsel %vm801, %v820, 0.0
          %v885 = vadd.f32 %v658, %v821
          %v886 = vadd.f32 %v659, %v822
          %v887 = vadd.f32 %v660, %v823
          %v888 = vadd.f32 %v661, %v824
          %v889 = vadd.f32 %v662, %v825
          %v890 = vadd.f32 %v663, %v826
          %v891 = vadd.f32 %v664, %v827
          %v892 = vadd.f32 %v665, %v828
          %v893 = vadd.f32 %v666, %v829
          %v894 = vadd.f32 %v667, %v830
          %v895 = vadd.f32 %v668, %v831
          %v896 = vadd.f32 %v669, %v832
          %v897 = vadd.f32 %v670, %v833
          %v898 = vadd.f32 %v671, %v834
          %v899 = vadd.f32 %v672, %v835
          %v900 = vadd.f32 %v673, %v836
          %v901 = vadd.f32 %v674, %v837
          %v902 = vadd.f32 %v675, %v838
          %v903 = vadd.f32 %v676, %v839
          %v904 = vadd.f32 %v677, %v840
          %v905 = vadd.f32 %v678, %v841
          %v906 = vadd.f32 %v679, %v842
          %v907 = vadd.f32 %v680, %v843
          %v908 = vadd.f32 %v681, %v844
          %v909 = vadd.f32 %v682, %v845
          %v910 = vadd.f32 %v683, %v846
          %v911 = vadd.f32 %v684, %v847
          %v912 = vadd.f32 %v685, %v848
          %v913 = vadd.f32 %v686, %v849
          %v914 = vadd.f32 %v687, %v850
          %v915 = vadd.f32 %v688, %v851
          %v916 = vadd.f32 %v689, %v852
          %v917 = vadd.f32 %v690, %v853
          %v918 = vadd.f32 %v691, %v854
          %v919 = vadd.f32 %v692, %v855
          %v920 = vadd.f32 %v693, %v856
          %v921 = vadd.f32 %v694, %v857
          %v922 = vadd.f32 %v695, %v858
          %v923 = vadd.f32 %v696, %v859
          %v924 = vadd.f32 %v697, %v860
          %v925 = vadd.f32 %v698, %v861
          %v926 = vadd.f32 %v699, %v862
          %v927 = vadd.f32 %v700, %v863
          %v928 = vadd.f32 %v701, %v864
          %v929 = vadd.f32 %v702, %v865
          %v930 = vadd.f32 %v703, %v866
          %v931 = vadd.f32 %v704, %v867
          %v932 = vadd.f32 %v705, %v868
          %v933 = vadd.f32 %v706, %v869
          %v934 = vadd.f32 %v707, %v870
          %v935 = vadd.f32 %v708, %v871
          %v936 = vadd.f32 %v709, %v872
          %v937 = vadd.f32 %v710, %v873
          %v938 = vadd.f32 %v711, %v874
          %v939 = vadd.f32 %v712, %v875
          %v940 = vadd.f32 %v713, %v876
          %v941 = vadd.f32 %v714, %v877
          %v942 = vadd.f32 %v715, %v878
          %v943 = vadd.f32 %v716, %v879
          %v944 = vadd.f32 %v717, %v880
          %v945 = vadd.f32 %v718, %v881
          %v946 = vadd.f32 %v719, %v882
          %v947 = vadd.f32 %v720, %v883
          %v948 = vadd.f32 %v721, %v884
          %v949 = vlaneseq
          %v950 = vshrl.u32 %v949, 7
          %v951 = vsub.s32 1, %v950
          %v952 = vrot.slane %v321, %v951
          %v953 = vlaneseq
          %v954 = vshrl.u32 %v953, 7
          %v955 = vsub.s32 3, %v954
          %v956 = vrot.slane %v321, %v955
          %v957 = vlaneseq
          %v958 = vshrl.u32 %v957, 7
          %v959 = vsub.s32 1, %v958
          %v960 = vrot.slane %v952, %v959
          %v961 = vlaneseq
          %v962 = vshrl.u32 %v961, 7
          %v963 = vsub.s32 1, %v962
          %v964 = vrot.slane %v956, %v963
          %vm965 = vcmp.eq.s32.totalorder %v236, %v960
          %vm966 = vcmp.eq.s32.totalorder %v236, %v964
          %vm967 = vcmp.eq.s32.totalorder %v237, %v960
          %vm968 = vcmp.eq.s32.totalorder %v237, %v964
          %vm969 = vcmp.eq.s32.totalorder %v238, %v960
          %vm970 = vcmp.eq.s32.totalorder %v238, %v964
          %vm971 = vcmp.eq.s32.totalorder %v239, %v960
          %vm972 = vcmp.eq.s32.totalorder %v239, %v964
          %vm973 = vcmp.eq.s32.totalorder %v240, %v960
          %vm974 = vcmp.eq.s32.totalorder %v240, %v964
          %vm975 = vcmp.eq.s32.totalorder %v241, %v960
          %vm976 = vcmp.eq.s32.totalorder %v241, %v964
          %vm977 = vcmp.eq.s32.totalorder %v242, %v960
          %vm978 = vcmp.eq.s32.totalorder %v242, %v964
          %vm979 = vcmp.eq.s32.totalorder %v243, %v960
          %vm980 = vcmp.eq.s32.totalorder %v243, %v964
          %vm981 = vcmp.eq.s32.totalorder %v244, %v960
          %vm982 = vcmp.eq.s32.totalorder %v244, %v964
          %vm983 = vcmp.eq.s32.totalorder %v245, %v960
          %vm984 = vcmp.eq.s32.totalorder %v245, %v964
          %vm985 = vcmp.eq.s32.totalorder %v246, %v960
          %vm986 = vcmp.eq.s32.totalorder %v246, %v964
          %vm987 = vcmp.eq.s32.totalorder %v247, %v960
          %vm988 = vcmp.eq.s32.totalorder %v247, %v964
          %vm989 = vcmp.eq.s32.totalorder %v248, %v960
          %vm990 = vcmp.eq.s32.totalorder %v248, %v964
          %vm991 = vcmp.eq.s32.totalorder %v249, %v960
          %vm992 = vcmp.eq.s32.totalorder %v249, %v964
          %vm993 = vcmp.eq.s32.totalorder %v250, %v960
          %vm994 = vcmp.eq.s32.totalorder %v250, %v964
          %vm995 = vcmp.eq.s32.totalorder %v251, %v960
          %vm996 = vcmp.eq.s32.totalorder %v251, %v964
          %vm997 = vcmp.eq.s32.totalorder %v252, %v960
          %vm998 = vcmp.eq.s32.totalorder %v252, %v964
          %vm999 = vcmp.eq.s32.totalorder %v253, %v960
          %vm1000 = vcmp.eq.s32.totalorder %v253, %v964
          %vm1001 = vcmp.eq.s32.totalorder %v254, %v960
          %vm1002 = vcmp.eq.s32.totalorder %v254, %v964
          %vm1003 = vcmp.eq.s32.totalorder %v255, %v960
          %vm1004 = vcmp.eq.s32.totalorder %v255, %v964
          %vm1005 = vcmp.eq.s32.totalorder %v256, %v960
          %vm1006 = vcmp.eq.s32.totalorder %v256, %v964
          %vm1007 = vcmp.eq.s32.totalorder %v257, %v960
          %vm1008 = vcmp.eq.s32.totalorder %v257, %v964
          %vm1009 = vcmp.eq.s32.totalorder %v258, %v960
          %vm1010 = vcmp.eq.s32.totalorder %v258, %v964
          %vm1011 = vcmp.eq.s32.totalorder %v259, %v960
          %vm1012 = vcmp.eq.s32.totalorder %v259, %v964
          %vm1013 = vcmp.eq.s32.totalorder %v260, %v960
          %vm1014 = vcmp.eq.s32.totalorder %v260, %v964
          %vm1015 = vcmp.eq.s32.totalorder %v261, %v960
          %vm1016 = vcmp.eq.s32.totalorder %v261, %v964
          %vm1017 = vcmp.eq.s32.totalorder %v262, %v960
          %vm1018 = vcmp.eq.s32.totalorder %v262, %v964
          %vm1019 = vcmp.eq.s32.totalorder %v263, %v960
          %vm1020 = vcmp.eq.s32.totalorder %v263, %v964
          %vm1021 = vcmp.eq.s32.totalorder %v264, %v960
          %vm1022 = vcmp.eq.s32.totalorder %v264, %v964
          %vm1023 = vcmp.eq.s32.totalorder %v265, %v960
          %vm1024 = vcmp.eq.s32.totalorder %v265, %v964
          %vm1025 = vcmp.eq.s32.totalorder %v266, %v960
          %vm1026 = vcmp.eq.s32.totalorder %v266, %v964
          %vm1027 = vcmp.eq.s32.totalorder %v267, %v960
          %vm1028 = vcmp.eq.s32.totalorder %v267, %v964
          %v1030 = vlaneseq
          %v1031 = vshrl.u32 %v1030, 7
          %v1032 = vsub.s32 1, %v1031
          %v1033 = vrot.slane %v331, %v1032
          %v1034 = vlaneseq
          %v1035 = vshrl.u32 %v1034, 7
          %v1036 = vsub.s32 3, %v1035
          %v1037 = vrot.slane %v331, %v1036
          %v1040 = vlaneseq
          %v1041 = vshrl.u32 %v1040, 7
          %v1042 = vsub.s32 1, %v1041
          %v1043 = vrot.slane %v1033, %v1042
          %v1044 = vlaneseq
          %v1045 = vshrl.u32 %v1044, 7
          %v1046 = vsub.s32 1, %v1045
          %v1047 = vrot.slane %v1037, %v1046
          %v1048 = vsel %vm965, %v1043, 0.0
          %v1049 = vsel %vm966, %v1047, 0.0
          %v1050 = vsel %vm967, %v1043, 0.0
          %v1051 = vsel %vm968, %v1047, 0.0
          %v1052 = vsel %vm969, %v1043, 0.0
          %v1053 = vsel %vm970, %v1047, 0.0
          %v1054 = vsel %vm971, %v1043, 0.0
          %v1055 = vsel %vm972, %v1047, 0.0
          %v1056 = vsel %vm973, %v1043, 0.0
          %v1057 = vsel %vm974, %v1047, 0.0
          %v1058 = vsel %vm975, %v1043, 0.0
          %v1059 = vsel %vm976, %v1047, 0.0
          %v1060 = vsel %vm977, %v1043, 0.0
          %v1061 = vsel %vm978, %v1047, 0.0
          %v1062 = vsel %vm979, %v1043, 0.0
          %v1063 = vsel %vm980, %v1047, 0.0
          %v1064 = vsel %vm981, %v1043, 0.0
          %v1065 = vsel %vm982, %v1047, 0.0
          %v1066 = vsel %vm983, %v1043, 0.0
          %v1067 = vsel %vm984, %v1047, 0.0
          %v1068 = vsel %vm985, %v1043, 0.0
          %v1069 = vsel %vm986, %v1047, 0.0
          %v1070 = vsel %vm987, %v1043, 0.0
          %v1071 = vsel %vm988, %v1047, 0.0
          %v1072 = vsel %vm989, %v1043, 0.0
          %v1073 = vsel %vm990, %v1047, 0.0
          %v1074 = vsel %vm991, %v1043, 0.0
          %v1075 = vsel %vm992, %v1047, 0.0
          %v1076 = vsel %vm993, %v1043, 0.0
          %v1077 = vsel %vm994, %v1047, 0.0
          %v1078 = vsel %vm995, %v1043, 0.0
          %v1079 = vsel %vm996, %v1047, 0.0
          %v1080 = vsel %vm997, %v1043, 0.0
          %v1081 = vsel %vm998, %v1047, 0.0
          %v1082 = vsel %vm999, %v1043, 0.0
          %v1083 = vsel %vm1000, %v1047, 0.0
          %v1084 = vsel %vm1001, %v1043, 0.0
          %v1085 = vsel %vm1002, %v1047, 0.0
          %v1086 = vsel %vm1003, %v1043, 0.0
          %v1087 = vsel %vm1004, %v1047, 0.0
          %v1088 = vsel %vm1005, %v1043, 0.0
          %v1089 = vsel %vm1006, %v1047, 0.0
          %v1090 = vsel %vm1007, %v1043, 0.0
          %v1091 = vsel %vm1008, %v1047, 0.0
          %v1092 = vsel %vm1009, %v1043, 0.0
          %v1093 = vsel %vm1010, %v1047, 0.0
          %v1094 = vsel %vm1011, %v1043, 0.0
          %v1095 = vsel %vm1012, %v1047, 0.0
          %v1096 = vsel %vm1013, %v1043, 0.0
          %v1097 = vsel %vm1014, %v1047, 0.0
          %v1098 = vsel %vm1015, %v1043, 0.0
          %v1099 = vsel %vm1016, %v1047, 0.0
          %v1100 = vsel %vm1017, %v1043, 0.0
          %v1101 = vsel %vm1018, %v1047, 0.0
          %v1102 = vsel %vm1019, %v1043, 0.0
          %v1103 = vsel %vm1020, %v1047, 0.0
          %v1104 = vsel %vm1021, %v1043, 0.0
          %v1105 = vsel %vm1022, %v1047, 0.0
          %v1106 = vsel %vm1023, %v1043, 0.0
          %v1107 = vsel %vm1024, %v1047, 0.0
          %v1108 = vsel %vm1025, %v1043, 0.0
          %v1109 = vsel %vm1026, %v1047, 0.0
          %v1110 = vsel %vm1027, %v1043, 0.0
          %v1111 = vsel %vm1028, %v1047, 0.0
          %v1112 = vadd.f32 %v885, %v1048
          %v1113 = vadd.f32 %v886, %v1049
          %v1114 = vadd.f32 %v887, %v1050
          %v1115 = vadd.f32 %v888, %v1051
          %v1116 = vadd.f32 %v889, %v1052
          %v1117 = vadd.f32 %v890, %v1053
          %v1118 = vadd.f32 %v891, %v1054
          %v1119 = vadd.f32 %v892, %v1055
          %v1120 = vadd.f32 %v893, %v1056
          %v1121 = vadd.f32 %v894, %v1057
          %v1122 = vadd.f32 %v895, %v1058
          %v1123 = vadd.f32 %v896, %v1059
          %v1124 = vadd.f32 %v897, %v1060
          %v1125 = vadd.f32 %v898, %v1061
          %v1126 = vadd.f32 %v899, %v1062
          %v1127 = vadd.f32 %v900, %v1063
          %v1128 = vadd.f32 %v901, %v1064
          %v1129 = vadd.f32 %v902, %v1065
          %v1130 = vadd.f32 %v903, %v1066
          %v1131 = vadd.f32 %v904, %v1067
          %v1132 = vadd.f32 %v905, %v1068
          %v1133 = vadd.f32 %v906, %v1069
          %v1134 = vadd.f32 %v907, %v1070
          %v1135 = vadd.f32 %v908, %v1071
          %v1136 = vadd.f32 %v909, %v1072
          %v1137 = vadd.f32 %v910, %v1073
          %v1138 = vadd.f32 %v911, %v1074
          %v1139 = vadd.f32 %v912, %v1075
          %v1140 = vadd.f32 %v913, %v1076
          %v1141 = vadd.f32 %v914, %v1077
          %v1142 = vadd.f32 %v915, %v1078
          %v1143 = vadd.f32 %v916, %v1079
          %v1144 = vadd.f32 %v917, %v1080
          %v1145 = vadd.f32 %v918, %v1081
          %v1146 = vadd.f32 %v919, %v1082
          %v1147 = vadd.f32 %v920, %v1083
          %v1148 = vadd.f32 %v921, %v1084
          %v1149 = vadd.f32 %v922, %v1085
          %v1150 = vadd.f32 %v923, %v1086
          %v1151 = vadd.f32 %v924, %v1087
          %v1152 = vadd.f32 %v925, %v1088
          %v1153 = vadd.f32 %v926, %v1089
          %v1154 = vadd.f32 %v927, %v1090
          %v1155 = vadd.f32 %v928, %v1091
          %v1156 = vadd.f32 %v929, %v1092
          %v1157 = vadd.f32 %v930, %v1093
          %v1158 = vadd.f32 %v931, %v1094
          %v1159 = vadd.f32 %v932, %v1095
          %v1160 = vadd.f32 %v933, %v1096
          %v1161 = vadd.f32 %v934, %v1097
          %v1162 = vadd.f32 %v935, %v1098
          %v1163 = vadd.f32 %v936, %v1099
          %v1164 = vadd.f32 %v937, %v1100
          %v1165 = vadd.f32 %v938, %v1101
          %v1166 = vadd.f32 %v939, %v1102
          %v1167 = vadd.f32 %v940, %v1103
          %v1168 = vadd.f32 %v941, %v1104
          %v1169 = vadd.f32 %v942, %v1105
          %v1170 = vadd.f32 %v943, %v1106
          %v1171 = vadd.f32 %v944, %v1107
          %v1172 = vadd.f32 %v945, %v1108
          %v1173 = vadd.f32 %v946, %v1109
          %v1174 = vadd.f32 %v947, %v1110
          %v1175 = vadd.f32 %v948, %v1111
          %v1178 = vunpack.c.l.s4 1983009808
          %v1179 = vunpack.c.0.s8 %v1178
          %v1180 = vlaneseq
          %v1181 = vshrl.u32 %v1180, 7
          %v1182 = vsub.s32 %v1179, %v1181
          %v1183 = vrot.slane %v294, %v1182
          %v1184 = vcombine.high %v1183, %v1183
          %1187 = vmatprep.subr.mxu0 %v1113
          %1188 = vmatpush1.msra.mxu0 %v1112
          %1189 = vmatprep.subr.mxu0 %v1115
          %1190 = vmatpush1.msra.mxu0 %v1114
          %1191 = vmatprep.subr.mxu0 %v1117
          %1192 = vmatpush1.msra.mxu0 %v1116
          %1193 = vmatprep.subr.mxu0 %v1119
          %1194 = vmatpush1.msra.mxu0 %v1118
          %1195 = vmatprep.subr.mxu0 %v1121
          %1196 = vmatpush1.msra.mxu0 %v1120
          %1197 = vmatprep.subr.mxu0 %v1123
          %1198 = vmatpush1.msra.mxu0 %v1122
          %1199 = vmatprep.subr.mxu0 %v1125
          %1200 = vmatpush1.msra.mxu0 %v1124
          %1201 = vmatprep.subr.mxu0 %v1127
          %1202 = vmatpush1.msra.mxu0 %v1126
          %1203 = vmatprep.subr.mxu0 %v1129
          %1204 = vmatpush1.msra.mxu0 %v1128
          %1205 = vmatprep.subr.mxu0 %v1131
          %1206 = vmatpush1.msra.mxu0 %v1130
          %1207 = vmatprep.subr.mxu0 %v1133
          %1208 = vmatpush1.msra.mxu0 %v1132
          %1209 = vmatprep.subr.mxu0 %v1135
          %1210 = vmatpush1.msra.mxu0 %v1134
          %1211 = vmatprep.subr.mxu0 %v1137
          %1212 = vmatpush1.msra.mxu0 %v1136
          %1213 = vmatprep.subr.mxu0 %v1139
          %1214 = vmatpush1.msra.mxu0 %v1138
          %1215 = vmatprep.subr.mxu0 %v1141
          %1216 = vmatpush1.msra.mxu0 %v1140
          %1217 = vmatprep.subr.mxu0 %v1143
          %1218 = vmatpush1.msra.mxu0 %v1142
          %1219 = vmatprep.subr.mxu0 %v1145
          %1220 = vmatpush1.msra.mxu0 %v1144
          %1221 = vmatprep.subr.mxu0 %v1147
          %1222 = vmatpush1.msra.mxu0 %v1146
          %1223 = vmatprep.subr.mxu0 %v1149
          %1224 = vmatpush1.msra.mxu0 %v1148
          %1225 = vmatprep.subr.mxu0 %v1151
          %1226 = vmatpush1.msra.mxu0 %v1150
          %1227 = vmatprep.subr.mxu0 %v1153
          %1228 = vmatpush1.msra.mxu0 %v1152
          %1229 = vmatprep.subr.mxu0 %v1155
          %1230 = vmatpush1.msra.mxu0 %v1154
          %1231 = vmatprep.subr.mxu0 %v1157
          %1232 = vmatpush1.msra.mxu0 %v1156
          %1233 = vmatprep.subr.mxu0 %v1159
          %1234 = vmatpush1.msra.mxu0 %v1158
          %1235 = vmatprep.subr.mxu0 %v1161
          %1236 = vmatpush1.msra.mxu0 %v1160
          %1237 = vmatprep.subr.mxu0 %v1163
          %1238 = vmatpush1.msra.mxu0 %v1162
          %1239 = vmatprep.subr.mxu0 %v1165
          %1240 = vmatpush1.msra.mxu0 %v1164
          %1241 = vmatprep.subr.mxu0 %v1167
          %1242 = vmatpush1.msra.mxu0 %v1166
          %1243 = vmatprep.subr.mxu0 %v1169
          %1244 = vmatpush1.msra.mxu0 %v1168
          %1245 = vmatprep.subr.mxu0 %v1171
          %1246 = vmatpush1.msra.mxu0 %v1170
          %1247 = vmatprep.subr.mxu0 %v1173
          %1248 = vmatpush1.msra.mxu0 %v1172
          %1249 = vmatprep.subr.mxu0 %v1175
          %1250 = vmatpush1.msra.mxu0 %v1174
          %1251 = vmatprep.mubr.f32.mxu0 %v1184
          %1252 = vmatmul.mubr.f32.gmra.mrb[0].mxu0 %v1183
          %v1253 = vpop.f32.mrb[0].mxu0
          %v1254 = vadd.f32 0.0, %v1253
          %v1255 = vpop.f32.mrb[0].mxu0
          %v1256 = vadd.f32 0.0, %v1255
          %1257 = vdwg.mxu0
          %v1260 = vcombine.low %v1254, %v1256
          %v1262 = vunpack.c.l.s4 1983009808
          %v1263 = vunpack.c.0.s8 %v1262
          %v1264 = vlaneseq
          %v1265 = vshrl.u32 %v1264, 7
          %v1266 = vsub.s32 %v1263, %v1265
          %v1267 = vrot.slane %v1260, %v1266
          %v1269 = vadd.f32 %v294, %v1267
          %1270 = vst [vmem:[#allocation3] sm:$0xf] %v1269
          %v1271 = vld [vmem:[#allocation3] sm:$0xf]
          %1272 = vst [vmem:[#allocation2] sm:$0xf] %v1271
        $region49: #{tpu_custom_call.1} parent=31 // loop_footer
          %s293 = sadd.s32 1, %s289
        $region50: #{tpu_custom_call.1} parent=31 // loop_footer_branch
          %288 = sbr.rel target = $region46
        $region51: #{tpu_custom_call.1} parent=31 // loop_exit
          _
        %v1273 = vld [vmem:[#allocation2] sm:$0xf]
        %v1274 = vld [vmem:[#allocation7] sm:$0xf]
        %v1275 = vadd.f32 %v1273, %v1274
        %v1276 = vadd.f32 %v1275, 1.0
        %v1277 = vmul.f32 %v1276, 16.0
        %v1278 = vsub.f32 %v1277, 1.0
        %v1279 = vmul.f32 %v1278, 0.5
        %v1280 = vmax.f32 %v1279, 0.0
        %v1281 = vmin.f32 %v1280, 15.0
        %v1282 = vfloor.f32 %v1281
        %v1283 = vsub.f32 %v1281, %v1282
        %v1284 = vsub.f32 1.0, %v1283
        %v1285 = vcvt.f32.s32.to.zero.pseudo %v1282
        %vm1286 = vcmp.gt.s32.totalorder %v1285, 0
        %v1287 = vsel %vm1286, %v1285, 0
        %vm1288 = vcmp.lt.s32.totalorder %v1287, 15
        %v1289 = vsel %vm1288, %v1287, 15
        %v1290 = vadd.s32 %v1289, 1
        %vm1291 = vcmp.lt.s32.totalorder %v1290, 15
        %v1292 = vsel %vm1291, %v1290, 15
        %v1293 = vmul.u32 %v1289, 16
        %v1294 = vrot.slane %v1289, 7
        %v1295 = vadd.s32 %v1293, %v1294
        %v1296 = vrot.slane %v1292, 7
        %v1297 = vadd.s32 %v1293, %v1296
        %v1298 = vmul.u32 %v1292, 16
        %v1299 = vadd.s32 %v1298, %v1294
        %v1300 = vadd.s32 %v1298, %v1296
        %v1302 = vrot.slane %v1284, 7
        %v1304 = vmul.f32 %v1284, %v1302
        %v1306 = vrot.slane %v1283, 7
        %v1308 = vmul.f32 %v1284, %v1306
        %v1309 = vmul.f32 %v1283, %v1302
        %v1310 = vmul.f32 %v1283, %v1306
        %v1311 = vld [vmem:[%s207] sm:$0xff]
        %v1312 = vlaneseq
        %v1313 = vshrl.u32 %v1312, 7
        %v1314 = vsub.s32 1, %v1313
        %v1315 = vrot.slane %v1295, %v1314
        %v1316 = vlaneseq
        %v1317 = vshrl.u32 %v1316, 7
        %v1318 = vsub.s32 3, %v1317
        %v1319 = vrot.slane %v1295, %v1318
        %v1320 = vlaneseq
        %v1321 = vshrl.u32 %v1320, 7
        %v1322 = vsub.s32 1, %v1321
        %v1323 = vrot.slane %v1315, %v1322
        %v1324 = vlaneseq
        %v1325 = vshrl.u32 %v1324, 7
        %v1326 = vsub.s32 1, %v1325
        %v1327 = vrot.slane %v1319, %v1326
        %vm1328 = vcmp.eq.s32.totalorder %v236, %v1323
        %vm1329 = vcmp.eq.s32.totalorder %v236, %v1327
        %vm1330 = vcmp.eq.s32.totalorder %v237, %v1323
        %vm1331 = vcmp.eq.s32.totalorder %v237, %v1327
        %vm1332 = vcmp.eq.s32.totalorder %v238, %v1323
        %vm1333 = vcmp.eq.s32.totalorder %v238, %v1327
        %vm1334 = vcmp.eq.s32.totalorder %v239, %v1323
        %vm1335 = vcmp.eq.s32.totalorder %v239, %v1327
        %vm1336 = vcmp.eq.s32.totalorder %v240, %v1323
        %vm1337 = vcmp.eq.s32.totalorder %v240, %v1327
        %vm1338 = vcmp.eq.s32.totalorder %v241, %v1323
        %vm1339 = vcmp.eq.s32.totalorder %v241, %v1327
        %vm1340 = vcmp.eq.s32.totalorder %v242, %v1323
        %vm1341 = vcmp.eq.s32.totalorder %v242, %v1327
        %vm1342 = vcmp.eq.s32.totalorder %v243, %v1323
        %vm1343 = vcmp.eq.s32.totalorder %v243, %v1327
        %vm1344 = vcmp.eq.s32.totalorder %v244, %v1323
        %vm1345 = vcmp.eq.s32.totalorder %v244, %v1327
        %vm1346 = vcmp.eq.s32.totalorder %v245, %v1323
        %vm1347 = vcmp.eq.s32.totalorder %v245, %v1327
        %vm1348 = vcmp.eq.s32.totalorder %v246, %v1323
        %vm1349 = vcmp.eq.s32.totalorder %v246, %v1327
        %vm1350 = vcmp.eq.s32.totalorder %v247, %v1323
        %vm1351 = vcmp.eq.s32.totalorder %v247, %v1327
        %vm1352 = vcmp.eq.s32.totalorder %v248, %v1323
        %vm1353 = vcmp.eq.s32.totalorder %v248, %v1327
        %vm1354 = vcmp.eq.s32.totalorder %v249, %v1323
        %vm1355 = vcmp.eq.s32.totalorder %v249, %v1327
        %vm1356 = vcmp.eq.s32.totalorder %v250, %v1323
        %vm1357 = vcmp.eq.s32.totalorder %v250, %v1327
        %vm1358 = vcmp.eq.s32.totalorder %v251, %v1323
        %vm1359 = vcmp.eq.s32.totalorder %v251, %v1327
        %vm1360 = vcmp.eq.s32.totalorder %v252, %v1323
        %vm1361 = vcmp.eq.s32.totalorder %v252, %v1327
        %vm1362 = vcmp.eq.s32.totalorder %v253, %v1323
        %vm1363 = vcmp.eq.s32.totalorder %v253, %v1327
        %vm1364 = vcmp.eq.s32.totalorder %v254, %v1323
        %vm1365 = vcmp.eq.s32.totalorder %v254, %v1327
        %vm1366 = vcmp.eq.s32.totalorder %v255, %v1323
        %vm1367 = vcmp.eq.s32.totalorder %v255, %v1327
        %vm1368 = vcmp.eq.s32.totalorder %v256, %v1323
        %vm1369 = vcmp.eq.s32.totalorder %v256, %v1327
        %vm1370 = vcmp.eq.s32.totalorder %v257, %v1323
        %vm1371 = vcmp.eq.s32.totalorder %v257, %v1327
        %vm1372 = vcmp.eq.s32.totalorder %v258, %v1323
        %vm1373 = vcmp.eq.s32.totalorder %v258, %v1327
        %vm1374 = vcmp.eq.s32.totalorder %v259, %v1323
        %vm1375 = vcmp.eq.s32.totalorder %v259, %v1327
        %vm1376 = vcmp.eq.s32.totalorder %v260, %v1323
        %vm1377 = vcmp.eq.s32.totalorder %v260, %v1327
        %vm1378 = vcmp.eq.s32.totalorder %v261, %v1323
        %vm1379 = vcmp.eq.s32.totalorder %v261, %v1327
        %vm1380 = vcmp.eq.s32.totalorder %v262, %v1323
        %vm1381 = vcmp.eq.s32.totalorder %v262, %v1327
        %vm1382 = vcmp.eq.s32.totalorder %v263, %v1323
        %vm1383 = vcmp.eq.s32.totalorder %v263, %v1327
        %vm1384 = vcmp.eq.s32.totalorder %v264, %v1323
        %vm1385 = vcmp.eq.s32.totalorder %v264, %v1327
        %vm1386 = vcmp.eq.s32.totalorder %v265, %v1323
        %vm1387 = vcmp.eq.s32.totalorder %v265, %v1327
        %vm1388 = vcmp.eq.s32.totalorder %v266, %v1323
        %vm1389 = vcmp.eq.s32.totalorder %v266, %v1327
        %vm1390 = vcmp.eq.s32.totalorder %v267, %v1323
        %vm1391 = vcmp.eq.s32.totalorder %v267, %v1327
        %v1393 = vlaneseq
        %v1394 = vshrl.u32 %v1393, 7
        %v1395 = vsub.s32 1, %v1394
        %v1396 = vrot.slane %v1304, %v1395
        %v1397 = vlaneseq
        %v1398 = vshrl.u32 %v1397, 7
        %v1399 = vsub.s32 3, %v1398
        %v1400 = vrot.slane %v1304, %v1399
        %v1403 = vlaneseq
        %v1404 = vshrl.u32 %v1403, 7
        %v1405 = vsub.s32 1, %v1404
        %v1406 = vrot.slane %v1396, %v1405
        %v1407 = vlaneseq
        %v1408 = vshrl.u32 %v1407, 7
        %v1409 = vsub.s32 1, %v1408
        %v1410 = vrot.slane %v1400, %v1409
        %v1411 = vsel %vm1328, %v1406, 0.0
        %v1412 = vsel %vm1329, %v1410, 0.0
        %v1413 = vsel %vm1330, %v1406, 0.0
        %v1414 = vsel %vm1331, %v1410, 0.0
        %v1415 = vsel %vm1332, %v1406, 0.0
        %v1416 = vsel %vm1333, %v1410, 0.0
        %v1417 = vsel %vm1334, %v1406, 0.0
        %v1418 = vsel %vm1335, %v1410, 0.0
        %v1419 = vsel %vm1336, %v1406, 0.0
        %v1420 = vsel %vm1337, %v1410, 0.0
        %v1421 = vsel %vm1338, %v1406, 0.0
        %v1422 = vsel %vm1339, %v1410, 0.0
        %v1423 = vsel %vm1340, %v1406, 0.0
        %v1424 = vsel %vm1341, %v1410, 0.0
        %v1425 = vsel %vm1342, %v1406, 0.0
        %v1426 = vsel %vm1343, %v1410, 0.0
        %v1427 = vsel %vm1344, %v1406, 0.0
        %v1428 = vsel %vm1345, %v1410, 0.0
        %v1429 = vsel %vm1346, %v1406, 0.0
        %v1430 = vsel %vm1347, %v1410, 0.0
        %v1431 = vsel %vm1348, %v1406, 0.0
        %v1432 = vsel %vm1349, %v1410, 0.0
        %v1433 = vsel %vm1350, %v1406, 0.0
        %v1434 = vsel %vm1351, %v1410, 0.0
        %v1435 = vsel %vm1352, %v1406, 0.0
        %v1436 = vsel %vm1353, %v1410, 0.0
        %v1437 = vsel %vm1354, %v1406, 0.0
        %v1438 = vsel %vm1355, %v1410, 0.0
        %v1439 = vsel %vm1356, %v1406, 0.0
        %v1440 = vsel %vm1357, %v1410, 0.0
        %v1441 = vsel %vm1358, %v1406, 0.0
        %v1442 = vsel %vm1359, %v1410, 0.0
        %v1443 = vsel %vm1360, %v1406, 0.0
        %v1444 = vsel %vm1361, %v1410, 0.0
        %v1445 = vsel %vm1362, %v1406, 0.0
        %v1446 = vsel %vm1363, %v1410, 0.0
        %v1447 = vsel %vm1364, %v1406, 0.0
        %v1448 = vsel %vm1365, %v1410, 0.0
        %v1449 = vsel %vm1366, %v1406, 0.0
        %v1450 = vsel %vm1367, %v1410, 0.0
        %v1451 = vsel %vm1368, %v1406, 0.0
        %v1452 = vsel %vm1369, %v1410, 0.0
        %v1453 = vsel %vm1370, %v1406, 0.0
        %v1454 = vsel %vm1371, %v1410, 0.0
        %v1455 = vsel %vm1372, %v1406, 0.0
        %v1456 = vsel %vm1373, %v1410, 0.0
        %v1457 = vsel %vm1374, %v1406, 0.0
        %v1458 = vsel %vm1375, %v1410, 0.0
        %v1459 = vsel %vm1376, %v1406, 0.0
        %v1460 = vsel %vm1377, %v1410, 0.0
        %v1461 = vsel %vm1378, %v1406, 0.0
        %v1462 = vsel %vm1379, %v1410, 0.0
        %v1463 = vsel %vm1380, %v1406, 0.0
        %v1464 = vsel %vm1381, %v1410, 0.0
        %v1465 = vsel %vm1382, %v1406, 0.0
        %v1466 = vsel %vm1383, %v1410, 0.0
        %v1467 = vsel %vm1384, %v1406, 0.0
        %v1468 = vsel %vm1385, %v1410, 0.0
        %v1469 = vsel %vm1386, %v1406, 0.0
        %v1470 = vsel %vm1387, %v1410, 0.0
        %v1471 = vsel %vm1388, %v1406, 0.0
        %v1472 = vsel %vm1389, %v1410, 0.0
        %v1473 = vsel %vm1390, %v1406, 0.0
        %v1474 = vsel %vm1391, %v1410, 0.0
        %v1475 = vlaneseq
        %v1476 = vshrl.u32 %v1475, 7
        %v1477 = vsub.s32 1, %v1476
        %v1478 = vrot.slane %v1297, %v1477
        %v1479 = vlaneseq
        %v1480 = vshrl.u32 %v1479, 7
        %v1481 = vsub.s32 3, %v1480
        %v1482 = vrot.slane %v1297, %v1481
        %v1483 = vlaneseq
        %v1484 = vshrl.u32 %v1483, 7
        %v1485 = vsub.s32 1, %v1484
        %v1486 = vrot.slane %v1478, %v1485
        %v1487 = vlaneseq
        %v1488 = vshrl.u32 %v1487, 7
        %v1489 = vsub.s32 1, %v1488
        %v1490 = vrot.slane %v1482, %v1489
        %vm1491 = vcmp.eq.s32.totalorder %v236, %v1486
        %vm1492 = vcmp.eq.s32.totalorder %v236, %v1490
        %vm1493 = vcmp.eq.s32.totalorder %v237, %v1486
        %vm1494 = vcmp.eq.s32.totalorder %v237, %v1490
        %vm1495 = vcmp.eq.s32.totalorder %v238, %v1486
        %vm1496 = vcmp.eq.s32.totalorder %v238, %v1490
        %vm1497 = vcmp.eq.s32.totalorder %v239, %v1486
        %vm1498 = vcmp.eq.s32.totalorder %v239, %v1490
        %vm1499 = vcmp.eq.s32.totalorder %v240, %v1486
        %vm1500 = vcmp.eq.s32.totalorder %v240, %v1490
        %vm1501 = vcmp.eq.s32.totalorder %v241, %v1486
        %vm1502 = vcmp.eq.s32.totalorder %v241, %v1490
        %vm1503 = vcmp.eq.s32.totalorder %v242, %v1486
        %vm1504 = vcmp.eq.s32.totalorder %v242, %v1490
        %vm1505 = vcmp.eq.s32.totalorder %v243, %v1486
        %vm1506 = vcmp.eq.s32.totalorder %v243, %v1490
        %vm1507 = vcmp.eq.s32.totalorder %v244, %v1486
        %vm1508 = vcmp.eq.s32.totalorder %v244, %v1490
        %vm1509 = vcmp.eq.s32.totalorder %v245, %v1486
        %vm1510 = vcmp.eq.s32.totalorder %v245, %v1490
        %vm1511 = vcmp.eq.s32.totalorder %v246, %v1486
        %vm1512 = vcmp.eq.s32.totalorder %v246, %v1490
        %vm1513 = vcmp.eq.s32.totalorder %v247, %v1486
        %vm1514 = vcmp.eq.s32.totalorder %v247, %v1490
        %vm1515 = vcmp.eq.s32.totalorder %v248, %v1486
        %vm1516 = vcmp.eq.s32.totalorder %v248, %v1490
        %vm1517 = vcmp.eq.s32.totalorder %v249, %v1486
        %vm1518 = vcmp.eq.s32.totalorder %v249, %v1490
        %vm1519 = vcmp.eq.s32.totalorder %v250, %v1486
        %vm1520 = vcmp.eq.s32.totalorder %v250, %v1490
        %vm1521 = vcmp.eq.s32.totalorder %v251, %v1486
        %vm1522 = vcmp.eq.s32.totalorder %v251, %v1490
        %vm1523 = vcmp.eq.s32.totalorder %v252, %v1486
        %vm1524 = vcmp.eq.s32.totalorder %v252, %v1490
        %vm1525 = vcmp.eq.s32.totalorder %v253, %v1486
        %vm1526 = vcmp.eq.s32.totalorder %v253, %v1490
        %vm1527 = vcmp.eq.s32.totalorder %v254, %v1486
        %vm1528 = vcmp.eq.s32.totalorder %v254, %v1490
        %vm1529 = vcmp.eq.s32.totalorder %v255, %v1486
        %vm1530 = vcmp.eq.s32.totalorder %v255, %v1490
        %vm1531 = vcmp.eq.s32.totalorder %v256, %v1486
        %vm1532 = vcmp.eq.s32.totalorder %v256, %v1490
        %vm1533 = vcmp.eq.s32.totalorder %v257, %v1486
        %vm1534 = vcmp.eq.s32.totalorder %v257, %v1490
        %vm1535 = vcmp.eq.s32.totalorder %v258, %v1486
        %vm1536 = vcmp.eq.s32.totalorder %v258, %v1490
        %vm1537 = vcmp.eq.s32.totalorder %v259, %v1486
        %vm1538 = vcmp.eq.s32.totalorder %v259, %v1490
        %vm1539 = vcmp.eq.s32.totalorder %v260, %v1486
        %vm1540 = vcmp.eq.s32.totalorder %v260, %v1490
        %vm1541 = vcmp.eq.s32.totalorder %v261, %v1486
        %vm1542 = vcmp.eq.s32.totalorder %v261, %v1490
        %vm1543 = vcmp.eq.s32.totalorder %v262, %v1486
        %vm1544 = vcmp.eq.s32.totalorder %v262, %v1490
        %vm1545 = vcmp.eq.s32.totalorder %v263, %v1486
        %vm1546 = vcmp.eq.s32.totalorder %v263, %v1490
        %vm1547 = vcmp.eq.s32.totalorder %v264, %v1486
        %vm1548 = vcmp.eq.s32.totalorder %v264, %v1490
        %vm1549 = vcmp.eq.s32.totalorder %v265, %v1486
        %vm1550 = vcmp.eq.s32.totalorder %v265, %v1490
        %vm1551 = vcmp.eq.s32.totalorder %v266, %v1486
        %vm1552 = vcmp.eq.s32.totalorder %v266, %v1490
        %vm1553 = vcmp.eq.s32.totalorder %v267, %v1486
        %vm1554 = vcmp.eq.s32.totalorder %v267, %v1490
        %v1556 = vlaneseq
        %v1557 = vshrl.u32 %v1556, 7
        %v1558 = vsub.s32 1, %v1557
        %v1559 = vrot.slane %v1308, %v1558
        %v1560 = vlaneseq
        %v1561 = vshrl.u32 %v1560, 7
        %v1562 = vsub.s32 3, %v1561
        %v1563 = vrot.slane %v1308, %v1562
        %v1566 = vlaneseq
        %v1567 = vshrl.u32 %v1566, 7
        %v1568 = vsub.s32 1, %v1567
        %v1569 = vrot.slane %v1559, %v1568
        %v1570 = vlaneseq
        %v1571 = vshrl.u32 %v1570, 7
        %v1572 = vsub.s32 1, %v1571
        %v1573 = vrot.slane %v1563, %v1572
        %v1574 = vsel %vm1491, %v1569, 0.0
        %v1575 = vsel %vm1492, %v1573, 0.0
        %v1576 = vsel %vm1493, %v1569, 0.0
        %v1577 = vsel %vm1494, %v1573, 0.0
        %v1578 = vsel %vm1495, %v1569, 0.0
        %v1579 = vsel %vm1496, %v1573, 0.0
        %v1580 = vsel %vm1497, %v1569, 0.0
        %v1581 = vsel %vm1498, %v1573, 0.0
        %v1582 = vsel %vm1499, %v1569, 0.0
        %v1583 = vsel %vm1500, %v1573, 0.0
        %v1584 = vsel %vm1501, %v1569, 0.0
        %v1585 = vsel %vm1502, %v1573, 0.0
        %v1586 = vsel %vm1503, %v1569, 0.0
        %v1587 = vsel %vm1504, %v1573, 0.0
        %v1588 = vsel %vm1505, %v1569, 0.0
        %v1589 = vsel %vm1506, %v1573, 0.0
        %v1590 = vsel %vm1507, %v1569, 0.0
        %v1591 = vsel %vm1508, %v1573, 0.0
        %v1592 = vsel %vm1509, %v1569, 0.0
        %v1593 = vsel %vm1510, %v1573, 0.0
        %v1594 = vsel %vm1511, %v1569, 0.0
        %v1595 = vsel %vm1512, %v1573, 0.0
        %v1596 = vsel %vm1513, %v1569, 0.0
        %v1597 = vsel %vm1514, %v1573, 0.0
        %v1598 = vsel %vm1515, %v1569, 0.0
        %v1599 = vsel %vm1516, %v1573, 0.0
        %v1600 = vsel %vm1517, %v1569, 0.0
        %v1601 = vsel %vm1518, %v1573, 0.0
        %v1602 = vsel %vm1519, %v1569, 0.0
        %v1603 = vsel %vm1520, %v1573, 0.0
        %v1604 = vsel %vm1521, %v1569, 0.0
        %v1605 = vsel %vm1522, %v1573, 0.0
        %v1606 = vsel %vm1523, %v1569, 0.0
        %v1607 = vsel %vm1524, %v1573, 0.0
        %v1608 = vsel %vm1525, %v1569, 0.0
        %v1609 = vsel %vm1526, %v1573, 0.0
        %v1610 = vsel %vm1527, %v1569, 0.0
        %v1611 = vsel %vm1528, %v1573, 0.0
        %v1612 = vsel %vm1529, %v1569, 0.0
        %v1613 = vsel %vm1530, %v1573, 0.0
        %v1614 = vsel %vm1531, %v1569, 0.0
        %v1615 = vsel %vm1532, %v1573, 0.0
        %v1616 = vsel %vm1533, %v1569, 0.0
        %v1617 = vsel %vm1534, %v1573, 0.0
        %v1618 = vsel %vm1535, %v1569, 0.0
        %v1619 = vsel %vm1536, %v1573, 0.0
        %v1620 = vsel %vm1537, %v1569, 0.0
        %v1621 = vsel %vm1538, %v1573, 0.0
        %v1622 = vsel %vm1539, %v1569, 0.0
        %v1623 = vsel %vm1540, %v1573, 0.0
        %v1624 = vsel %vm1541, %v1569, 0.0
        %v1625 = vsel %vm1542, %v1573, 0.0
        %v1626 = vsel %vm1543, %v1569, 0.0
        %v1627 = vsel %vm1544, %v1573, 0.0
        %v1628 = vsel %vm1545, %v1569, 0.0
        %v1629 = vsel %vm1546, %v1573, 0.0
        %v1630 = vsel %vm1547, %v1569, 0.0
        %v1631 = vsel %vm1548, %v1573, 0.0
        %v1632 = vsel %vm1549, %v1569, 0.0
        %v1633 = vsel %vm1550, %v1573, 0.0
        %v1634 = vsel %vm1551, %v1569, 0.0
        %v1635 = vsel %vm1552, %v1573, 0.0
        %v1636 = vsel %vm1553, %v1569, 0.0
        %v1637 = vsel %vm1554, %v1573, 0.0
        %v1638 = vadd.f32 %v1411, %v1574
        %v1639 = vadd.f32 %v1412, %v1575
        %v1640 = vadd.f32 %v1413, %v1576
        %v1641 = vadd.f32 %v1414, %v1577
        %v1642 = vadd.f32 %v1415, %v1578
        %v1643 = vadd.f32 %v1416, %v1579
        %v1644 = vadd.f32 %v1417, %v1580
        %v1645 = vadd.f32 %v1418, %v1581
        %v1646 = vadd.f32 %v1419, %v1582
        %v1647 = vadd.f32 %v1420, %v1583
        %v1648 = vadd.f32 %v1421, %v1584
        %v1649 = vadd.f32 %v1422, %v1585
        %v1650 = vadd.f32 %v1423, %v1586
        %v1651 = vadd.f32 %v1424, %v1587
        %v1652 = vadd.f32 %v1425, %v1588
        %v1653 = vadd.f32 %v1426, %v1589
        %v1654 = vadd.f32 %v1427, %v1590
        %v1655 = vadd.f32 %v1428, %v1591
        %v1656 = vadd.f32 %v1429, %v1592
        %v1657 = vadd.f32 %v1430, %v1593
        %v1658 = vadd.f32 %v1431, %v1594
        %v1659 = vadd.f32 %v1432, %v1595
        %v1660 = vadd.f32 %v1433, %v1596
        %v1661 = vadd.f32 %v1434, %v1597
        %v1662 = vadd.f32 %v1435, %v1598
        %v1663 = vadd.f32 %v1436, %v1599
        %v1664 = vadd.f32 %v1437, %v1600
        %v1665 = vadd.f32 %v1438, %v1601
        %v1666 = vadd.f32 %v1439, %v1602
        %v1667 = vadd.f32 %v1440, %v1603
        %v1668 = vadd.f32 %v1441, %v1604
        %v1669 = vadd.f32 %v1442, %v1605
        %v1670 = vadd.f32 %v1443, %v1606
        %v1671 = vadd.f32 %v1444, %v1607
        %v1672 = vadd.f32 %v1445, %v1608
        %v1673 = vadd.f32 %v1446, %v1609
        %v1674 = vadd.f32 %v1447, %v1610
        %v1675 = vadd.f32 %v1448, %v1611
        %v1676 = vadd.f32 %v1449, %v1612
        %v1677 = vadd.f32 %v1450, %v1613
        %v1678 = vadd.f32 %v1451, %v1614
        %v1679 = vadd.f32 %v1452, %v1615
        %v1680 = vadd.f32 %v1453, %v1616
        %v1681 = vadd.f32 %v1454, %v1617
        %v1682 = vadd.f32 %v1455, %v1618
        %v1683 = vadd.f32 %v1456, %v1619
        %v1684 = vadd.f32 %v1457, %v1620
        %v1685 = vadd.f32 %v1458, %v1621
        %v1686 = vadd.f32 %v1459, %v1622
        %v1687 = vadd.f32 %v1460, %v1623
        %v1688 = vadd.f32 %v1461, %v1624
        %v1689 = vadd.f32 %v1462, %v1625
        %v1690 = vadd.f32 %v1463, %v1626
        %v1691 = vadd.f32 %v1464, %v1627
        %v1692 = vadd.f32 %v1465, %v1628
        %v1693 = vadd.f32 %v1466, %v1629
        %v1694 = vadd.f32 %v1467, %v1630
        %v1695 = vadd.f32 %v1468, %v1631
        %v1696 = vadd.f32 %v1469, %v1632
        %v1697 = vadd.f32 %v1470, %v1633
        %v1698 = vadd.f32 %v1471, %v1634
        %v1699 = vadd.f32 %v1472, %v1635
        %v1700 = vadd.f32 %v1473, %v1636
        %v1701 = vadd.f32 %v1474, %v1637
        %v1702 = vlaneseq
        %v1703 = vshrl.u32 %v1702, 7
        %v1704 = vsub.s32 1, %v1703
        %v1705 = vrot.slane %v1299, %v1704
        %v1706 = vlaneseq
        %v1707 = vshrl.u32 %v1706, 7
        %v1708 = vsub.s32 3, %v1707
        %v1709 = vrot.slane %v1299, %v1708
        %v1710 = vlaneseq
        %v1711 = vshrl.u32 %v1710, 7
        %v1712 = vsub.s32 1, %v1711
        %v1713 = vrot.slane %v1705, %v1712
        %v1714 = vlaneseq
        %v1715 = vshrl.u32 %v1714, 7
        %v1716 = vsub.s32 1, %v1715
        %v1717 = vrot.slane %v1709, %v1716
        %vm1718 = vcmp.eq.s32.totalorder %v236, %v1713
        %vm1719 = vcmp.eq.s32.totalorder %v236, %v1717
        %vm1720 = vcmp.eq.s32.totalorder %v237, %v1713
        %vm1721 = vcmp.eq.s32.totalorder %v237, %v1717
        %vm1722 = vcmp.eq.s32.totalorder %v238, %v1713
        %vm1723 = vcmp.eq.s32.totalorder %v238, %v1717
        %vm1724 = vcmp.eq.s32.totalorder %v239, %v1713
        %vm1725 = vcmp.eq.s32.totalorder %v239, %v1717
        %vm1726 = vcmp.eq.s32.totalorder %v240, %v1713
        %vm1727 = vcmp.eq.s32.totalorder %v240, %v1717
        %vm1728 = vcmp.eq.s32.totalorder %v241, %v1713
        %vm1729 = vcmp.eq.s32.totalorder %v241, %v1717
        %vm1730 = vcmp.eq.s32.totalorder %v242, %v1713
        %vm1731 = vcmp.eq.s32.totalorder %v242, %v1717
        %vm1732 = vcmp.eq.s32.totalorder %v243, %v1713
        %vm1733 = vcmp.eq.s32.totalorder %v243, %v1717
        %vm1734 = vcmp.eq.s32.totalorder %v244, %v1713
        %vm1735 = vcmp.eq.s32.totalorder %v244, %v1717
        %vm1736 = vcmp.eq.s32.totalorder %v245, %v1713
        %vm1737 = vcmp.eq.s32.totalorder %v245, %v1717
        %vm1738 = vcmp.eq.s32.totalorder %v246, %v1713
        %vm1739 = vcmp.eq.s32.totalorder %v246, %v1717
        %vm1740 = vcmp.eq.s32.totalorder %v247, %v1713
        %vm1741 = vcmp.eq.s32.totalorder %v247, %v1717
        %vm1742 = vcmp.eq.s32.totalorder %v248, %v1713
        %vm1743 = vcmp.eq.s32.totalorder %v248, %v1717
        %vm1744 = vcmp.eq.s32.totalorder %v249, %v1713
        %vm1745 = vcmp.eq.s32.totalorder %v249, %v1717
        %vm1746 = vcmp.eq.s32.totalorder %v250, %v1713
        %vm1747 = vcmp.eq.s32.totalorder %v250, %v1717
        %vm1748 = vcmp.eq.s32.totalorder %v251, %v1713
        %vm1749 = vcmp.eq.s32.totalorder %v251, %v1717
        %vm1750 = vcmp.eq.s32.totalorder %v252, %v1713
        %vm1751 = vcmp.eq.s32.totalorder %v252, %v1717
        %vm1752 = vcmp.eq.s32.totalorder %v253, %v1713
        %vm1753 = vcmp.eq.s32.totalorder %v253, %v1717
        %vm1754 = vcmp.eq.s32.totalorder %v254, %v1713
        %vm1755 = vcmp.eq.s32.totalorder %v254, %v1717
        %vm1756 = vcmp.eq.s32.totalorder %v255, %v1713
        %vm1757 = vcmp.eq.s32.totalorder %v255, %v1717
        %vm1758 = vcmp.eq.s32.totalorder %v256, %v1713
        %vm1759 = vcmp.eq.s32.totalorder %v256, %v1717
        %vm1760 = vcmp.eq.s32.totalorder %v257, %v1713
        %vm1761 = vcmp.eq.s32.totalorder %v257, %v1717
        %vm1762 = vcmp.eq.s32.totalorder %v258, %v1713
        %vm1763 = vcmp.eq.s32.totalorder %v258, %v1717
        %vm1764 = vcmp.eq.s32.totalorder %v259, %v1713
        %vm1765 = vcmp.eq.s32.totalorder %v259, %v1717
        %vm1766 = vcmp.eq.s32.totalorder %v260, %v1713
        %vm1767 = vcmp.eq.s32.totalorder %v260, %v1717
        %vm1768 = vcmp.eq.s32.totalorder %v261, %v1713
        %vm1769 = vcmp.eq.s32.totalorder %v261, %v1717
        %vm1770 = vcmp.eq.s32.totalorder %v262, %v1713
        %vm1771 = vcmp.eq.s32.totalorder %v262, %v1717
        %vm1772 = vcmp.eq.s32.totalorder %v263, %v1713
        %vm1773 = vcmp.eq.s32.totalorder %v263, %v1717
        %vm1774 = vcmp.eq.s32.totalorder %v264, %v1713
        %vm1775 = vcmp.eq.s32.totalorder %v264, %v1717
        %vm1776 = vcmp.eq.s32.totalorder %v265, %v1713
        %vm1777 = vcmp.eq.s32.totalorder %v265, %v1717
        %vm1778 = vcmp.eq.s32.totalorder %v266, %v1713
        %vm1779 = vcmp.eq.s32.totalorder %v266, %v1717
        %vm1780 = vcmp.eq.s32.totalorder %v267, %v1713
        %vm1781 = vcmp.eq.s32.totalorder %v267, %v1717
        %v1783 = vlaneseq
        %v1784 = vshrl.u32 %v1783, 7
        %v1785 = vsub.s32 1, %v1784
        %v1786 = vrot.slane %v1309, %v1785
        %v1787 = vlaneseq
        %v1788 = vshrl.u32 %v1787, 7
        %v1789 = vsub.s32 3, %v1788
        %v1790 = vrot.slane %v1309, %v1789
        %v1793 = vlaneseq
        %v1794 = vshrl.u32 %v1793, 7
        %v1795 = vsub.s32 1, %v1794
        %v1796 = vrot.slane %v1786, %v1795
        %v1797 = vlaneseq
        %v1798 = vshrl.u32 %v1797, 7
        %v1799 = vsub.s32 1, %v1798
        %v1800 = vrot.slane %v1790, %v1799
        %v1801 = vsel %vm1718, %v1796, 0.0
        %v1802 = vsel %vm1719, %v1800, 0.0
        %v1803 = vsel %vm1720, %v1796, 0.0
        %v1804 = vsel %vm1721, %v1800, 0.0
        %v1805 = vsel %vm1722, %v1796, 0.0
        %v1806 = vsel %vm1723, %v1800, 0.0
        %v1807 = vsel %vm1724, %v1796, 0.0
        %v1808 = vsel %vm1725, %v1800, 0.0
        %v1809 = vsel %vm1726, %v1796, 0.0
        %v1810 = vsel %vm1727, %v1800, 0.0
        %v1811 = vsel %vm1728, %v1796, 0.0
        %v1812 = vsel %vm1729, %v1800, 0.0
        %v1813 = vsel %vm1730, %v1796, 0.0
        %v1814 = vsel %vm1731, %v1800, 0.0
        %v1815 = vsel %vm1732, %v1796, 0.0
        %v1816 = vsel %vm1733, %v1800, 0.0
        %v1817 = vsel %vm1734, %v1796, 0.0
        %v1818 = vsel %vm1735, %v1800, 0.0
        %v1819 = vsel %vm1736, %v1796, 0.0
        %v1820 = vsel %vm1737, %v1800, 0.0
        %v1821 = vsel %vm1738, %v1796, 0.0
        %v1822 = vsel %vm1739, %v1800, 0.0
        %v1823 = vsel %vm1740, %v1796, 0.0
        %v1824 = vsel %vm1741, %v1800, 0.0
        %v1825 = vsel %vm1742, %v1796, 0.0
        %v1826 = vsel %vm1743, %v1800, 0.0
        %v1827 = vsel %vm1744, %v1796, 0.0
        %v1828 = vsel %vm1745, %v1800, 0.0
        %v1829 = vsel %vm1746, %v1796, 0.0
        %v1830 = vsel %vm1747, %v1800, 0.0
        %v1831 = vsel %vm1748, %v1796, 0.0
        %v1832 = vsel %vm1749, %v1800, 0.0
        %v1833 = vsel %vm1750, %v1796, 0.0
        %v1834 = vsel %vm1751, %v1800, 0.0
        %v1835 = vsel %vm1752, %v1796, 0.0
        %v1836 = vsel %vm1753, %v1800, 0.0
        %v1837 = vsel %vm1754, %v1796, 0.0
        %v1838 = vsel %vm1755, %v1800, 0.0
        %v1839 = vsel %vm1756, %v1796, 0.0
        %v1840 = vsel %vm1757, %v1800, 0.0
        %v1841 = vsel %vm1758, %v1796, 0.0
        %v1842 = vsel %vm1759, %v1800, 0.0
        %v1843 = vsel %vm1760, %v1796, 0.0
        %v1844 = vsel %vm1761, %v1800, 0.0
        %v1845 = vsel %vm1762, %v1796, 0.0
        %v1846 = vsel %vm1763, %v1800, 0.0
        %v1847 = vsel %vm1764, %v1796, 0.0
        %v1848 = vsel %vm1765, %v1800, 0.0
        %v1849 = vsel %vm1766, %v1796, 0.0
        %v1850 = vsel %vm1767, %v1800, 0.0
        %v1851 = vsel %vm1768, %v1796, 0.0
        %v1852 = vsel %vm1769, %v1800, 0.0
        %v1853 = vsel %vm1770, %v1796, 0.0
        %v1854 = vsel %vm1771, %v1800, 0.0
        %v1855 = vsel %vm1772, %v1796, 0.0
        %v1856 = vsel %vm1773, %v1800, 0.0
        %v1857 = vsel %vm1774, %v1796, 0.0
        %v1858 = vsel %vm1775, %v1800, 0.0
        %v1859 = vsel %vm1776, %v1796, 0.0
        %v1860 = vsel %vm1777, %v1800, 0.0
        %v1861 = vsel %vm1778, %v1796, 0.0
        %v1862 = vsel %vm1779, %v1800, 0.0
        %v1863 = vsel %vm1780, %v1796, 0.0
        %v1864 = vsel %vm1781, %v1800, 0.0
        %v1865 = vadd.f32 %v1638, %v1801
        %v1866 = vadd.f32 %v1639, %v1802
        %v1867 = vadd.f32 %v1640, %v1803
        %v1868 = vadd.f32 %v1641, %v1804
        %v1869 = vadd.f32 %v1642, %v1805
        %v1870 = vadd.f32 %v1643, %v1806
        %v1871 = vadd.f32 %v1644, %v1807
        %v1872 = vadd.f32 %v1645, %v1808
        %v1873 = vadd.f32 %v1646, %v1809
        %v1874 = vadd.f32 %v1647, %v1810
        %v1875 = vadd.f32 %v1648, %v1811
        %v1876 = vadd.f32 %v1649, %v1812
        %v1877 = vadd.f32 %v1650, %v1813
        %v1878 = vadd.f32 %v1651, %v1814
        %v1879 = vadd.f32 %v1652, %v1815
        %v1880 = vadd.f32 %v1653, %v1816
        %v1881 = vadd.f32 %v1654, %v1817
        %v1882 = vadd.f32 %v1655, %v1818
        %v1883 = vadd.f32 %v1656, %v1819
        %v1884 = vadd.f32 %v1657, %v1820
        %v1885 = vadd.f32 %v1658, %v1821
        %v1886 = vadd.f32 %v1659, %v1822
        %v1887 = vadd.f32 %v1660, %v1823
        %v1888 = vadd.f32 %v1661, %v1824
        %v1889 = vadd.f32 %v1662, %v1825
        %v1890 = vadd.f32 %v1663, %v1826
        %v1891 = vadd.f32 %v1664, %v1827
        %v1892 = vadd.f32 %v1665, %v1828
        %v1893 = vadd.f32 %v1666, %v1829
        %v1894 = vadd.f32 %v1667, %v1830
        %v1895 = vadd.f32 %v1668, %v1831
        %v1896 = vadd.f32 %v1669, %v1832
        %v1897 = vadd.f32 %v1670, %v1833
        %v1898 = vadd.f32 %v1671, %v1834
        %v1899 = vadd.f32 %v1672, %v1835
        %v1900 = vadd.f32 %v1673, %v1836
        %v1901 = vadd.f32 %v1674, %v1837
        %v1902 = vadd.f32 %v1675, %v1838
        %v1903 = vadd.f32 %v1676, %v1839
        %v1904 = vadd.f32 %v1677, %v1840
        %v1905 = vadd.f32 %v1678, %v1841
        %v1906 = vadd.f32 %v1679, %v1842
        %v1907 = vadd.f32 %v1680, %v1843
        %v1908 = vadd.f32 %v1681, %v1844
        %v1909 = vadd.f32 %v1682, %v1845
        %v1910 = vadd.f32 %v1683, %v1846
        %v1911 = vadd.f32 %v1684, %v1847
        %v1912 = vadd.f32 %v1685, %v1848
        %v1913 = vadd.f32 %v1686, %v1849
        %v1914 = vadd.f32 %v1687, %v1850
        %v1915 = vadd.f32 %v1688, %v1851
        %v1916 = vadd.f32 %v1689, %v1852
        %v1917 = vadd.f32 %v1690, %v1853
        %v1918 = vadd.f32 %v1691, %v1854
        %v1919 = vadd.f32 %v1692, %v1855
        %v1920 = vadd.f32 %v1693, %v1856
        %v1921 = vadd.f32 %v1694, %v1857
        %v1922 = vadd.f32 %v1695, %v1858
        %v1923 = vadd.f32 %v1696, %v1859
        %v1924 = vadd.f32 %v1697, %v1860
        %v1925 = vadd.f32 %v1698, %v1861
        %v1926 = vadd.f32 %v1699, %v1862
        %v1927 = vadd.f32 %v1700, %v1863
        %v1928 = vadd.f32 %v1701, %v1864
        %v1929 = vlaneseq
        %v1930 = vshrl.u32 %v1929, 7
        %v1931 = vsub.s32 1, %v1930
        %v1932 = vrot.slane %v1300, %v1931
        %v1933 = vlaneseq
        %v1934 = vshrl.u32 %v1933, 7
        %v1935 = vsub.s32 3, %v1934
        %v1936 = vrot.slane %v1300, %v1935
        %v1937 = vlaneseq
        %v1938 = vshrl.u32 %v1937, 7
        %v1939 = vsub.s32 1, %v1938
        %v1940 = vrot.slane %v1932, %v1939
        %v1941 = vlaneseq
        %v1942 = vshrl.u32 %v1941, 7
        %v1943 = vsub.s32 1, %v1942
        %v1944 = vrot.slane %v1936, %v1943
        %vm1945 = vcmp.eq.s32.totalorder %v236, %v1940
        %vm1946 = vcmp.eq.s32.totalorder %v236, %v1944
        %vm1947 = vcmp.eq.s32.totalorder %v237, %v1940
        %vm1948 = vcmp.eq.s32.totalorder %v237, %v1944
        %vm1949 = vcmp.eq.s32.totalorder %v238, %v1940
        %vm1950 = vcmp.eq.s32.totalorder %v238, %v1944
        %vm1951 = vcmp.eq.s32.totalorder %v239, %v1940
        %vm1952 = vcmp.eq.s32.totalorder %v239, %v1944
        %vm1953 = vcmp.eq.s32.totalorder %v240, %v1940
        %vm1954 = vcmp.eq.s32.totalorder %v240, %v1944
        %vm1955 = vcmp.eq.s32.totalorder %v241, %v1940
        %vm1956 = vcmp.eq.s32.totalorder %v241, %v1944
        %vm1957 = vcmp.eq.s32.totalorder %v242, %v1940
        %vm1958 = vcmp.eq.s32.totalorder %v242, %v1944
        %vm1959 = vcmp.eq.s32.totalorder %v243, %v1940
        %vm1960 = vcmp.eq.s32.totalorder %v243, %v1944
        %vm1961 = vcmp.eq.s32.totalorder %v244, %v1940
        %vm1962 = vcmp.eq.s32.totalorder %v244, %v1944
        %vm1963 = vcmp.eq.s32.totalorder %v245, %v1940
        %vm1964 = vcmp.eq.s32.totalorder %v245, %v1944
        %vm1965 = vcmp.eq.s32.totalorder %v246, %v1940
        %vm1966 = vcmp.eq.s32.totalorder %v246, %v1944
        %vm1967 = vcmp.eq.s32.totalorder %v247, %v1940
        %vm1968 = vcmp.eq.s32.totalorder %v247, %v1944
        %vm1969 = vcmp.eq.s32.totalorder %v248, %v1940
        %vm1970 = vcmp.eq.s32.totalorder %v248, %v1944
        %vm1971 = vcmp.eq.s32.totalorder %v249, %v1940
        %vm1972 = vcmp.eq.s32.totalorder %v249, %v1944
        %vm1973 = vcmp.eq.s32.totalorder %v250, %v1940
        %vm1974 = vcmp.eq.s32.totalorder %v250, %v1944
        %vm1975 = vcmp.eq.s32.totalorder %v251, %v1940
        %vm1976 = vcmp.eq.s32.totalorder %v251, %v1944
        %vm1977 = vcmp.eq.s32.totalorder %v252, %v1940
        %vm1978 = vcmp.eq.s32.totalorder %v252, %v1944
        %vm1979 = vcmp.eq.s32.totalorder %v253, %v1940
        %vm1980 = vcmp.eq.s32.totalorder %v253, %v1944
        %vm1981 = vcmp.eq.s32.totalorder %v254, %v1940
        %vm1982 = vcmp.eq.s32.totalorder %v254, %v1944
        %vm1983 = vcmp.eq.s32.totalorder %v255, %v1940
        %vm1984 = vcmp.eq.s32.totalorder %v255, %v1944
        %vm1985 = vcmp.eq.s32.totalorder %v256, %v1940
        %vm1986 = vcmp.eq.s32.totalorder %v256, %v1944
        %vm1987 = vcmp.eq.s32.totalorder %v257, %v1940
        %vm1988 = vcmp.eq.s32.totalorder %v257, %v1944
        %vm1989 = vcmp.eq.s32.totalorder %v258, %v1940
        %vm1990 = vcmp.eq.s32.totalorder %v258, %v1944
        %vm1991 = vcmp.eq.s32.totalorder %v259, %v1940
        %vm1992 = vcmp.eq.s32.totalorder %v259, %v1944
        %vm1993 = vcmp.eq.s32.totalorder %v260, %v1940
        %vm1994 = vcmp.eq.s32.totalorder %v260, %v1944
        %vm1995 = vcmp.eq.s32.totalorder %v261, %v1940
        %vm1996 = vcmp.eq.s32.totalorder %v261, %v1944
        %vm1997 = vcmp.eq.s32.totalorder %v262, %v1940
        %vm1998 = vcmp.eq.s32.totalorder %v262, %v1944
        %vm1999 = vcmp.eq.s32.totalorder %v263, %v1940
        %vm2000 = vcmp.eq.s32.totalorder %v263, %v1944
        %vm2001 = vcmp.eq.s32.totalorder %v264, %v1940
        %vm2002 = vcmp.eq.s32.totalorder %v264, %v1944
        %vm2003 = vcmp.eq.s32.totalorder %v265, %v1940
        %vm2004 = vcmp.eq.s32.totalorder %v265, %v1944
        %vm2005 = vcmp.eq.s32.totalorder %v266, %v1940
        %vm2006 = vcmp.eq.s32.totalorder %v266, %v1944
        %vm2007 = vcmp.eq.s32.totalorder %v267, %v1940
        %vm2008 = vcmp.eq.s32.totalorder %v267, %v1944
        %v2010 = vlaneseq
        %v2011 = vshrl.u32 %v2010, 7
        %v2012 = vsub.s32 1, %v2011
        %v2013 = vrot.slane %v1310, %v2012
        %v2014 = vlaneseq
        %v2015 = vshrl.u32 %v2014, 7
        %v2016 = vsub.s32 3, %v2015
        %v2017 = vrot.slane %v1310, %v2016
        %v2020 = vlaneseq
        %v2021 = vshrl.u32 %v2020, 7
        %v2022 = vsub.s32 1, %v2021
        %v2023 = vrot.slane %v2013, %v2022
        %v2024 = vlaneseq
        %v2025 = vshrl.u32 %v2024, 7
        %v2026 = vsub.s32 1, %v2025
        %v2027 = vrot.slane %v2017, %v2026
        %v2028 = vsel %vm1945, %v2023, 0.0
        %v2029 = vsel %vm1946, %v2027, 0.0
        %v2030 = vsel %vm1947, %v2023, 0.0
        %v2031 = vsel %vm1948, %v2027, 0.0
        %v2032 = vsel %vm1949, %v2023, 0.0
        %v2033 = vsel %vm1950, %v2027, 0.0
        %v2034 = vsel %vm1951, %v2023, 0.0
        %v2035 = vsel %vm1952, %v2027, 0.0
        %v2036 = vsel %vm1953, %v2023, 0.0
        %v2037 = vsel %vm1954, %v2027, 0.0
        %v2038 = vsel %vm1955, %v2023, 0.0
        %v2039 = vsel %vm1956, %v2027, 0.0
        %v2040 = vsel %vm1957, %v2023, 0.0
        %v2041 = vsel %vm1958, %v2027, 0.0
        %v2042 = vsel %vm1959, %v2023, 0.0
        %v2043 = vsel %vm1960, %v2027, 0.0
        %v2044 = vsel %vm1961, %v2023, 0.0
        %v2045 = vsel %vm1962, %v2027, 0.0
        %v2046 = vsel %vm1963, %v2023, 0.0
        %v2047 = vsel %vm1964, %v2027, 0.0
        %v2048 = vsel %vm1965, %v2023, 0.0
        %v2049 = vsel %vm1966, %v2027, 0.0
        %v2050 = vsel %vm1967, %v2023, 0.0
        %v2051 = vsel %vm1968, %v2027, 0.0
        %v2052 = vsel %vm1969, %v2023, 0.0
        %v2053 = vsel %vm1970, %v2027, 0.0
        %v2054 = vsel %vm1971, %v2023, 0.0
        %v2055 = vsel %vm1972, %v2027, 0.0
        %v2056 = vsel %vm1973, %v2023, 0.0
        %v2057 = vsel %vm1974, %v2027, 0.0
        %v2058 = vsel %vm1975, %v2023, 0.0
        %v2059 = vsel %vm1976, %v2027, 0.0
        %v2060 = vsel %vm1977, %v2023, 0.0
        %v2061 = vsel %vm1978, %v2027, 0.0
        %v2062 = vsel %vm1979, %v2023, 0.0
        %v2063 = vsel %vm1980, %v2027, 0.0
        %v2064 = vsel %vm1981, %v2023, 0.0
        %v2065 = vsel %vm1982, %v2027, 0.0
        %v2066 = vsel %vm1983, %v2023, 0.0
        %v2067 = vsel %vm1984, %v2027, 0.0
        %v2068 = vsel %vm1985, %v2023, 0.0
        %v2069 = vsel %vm1986, %v2027, 0.0
        %v2070 = vsel %vm1987, %v2023, 0.0
        %v2071 = vsel %vm1988, %v2027, 0.0
        %v2072 = vsel %vm1989, %v2023, 0.0
        %v2073 = vsel %vm1990, %v2027, 0.0
        %v2074 = vsel %vm1991, %v2023, 0.0
        %v2075 = vsel %vm1992, %v2027, 0.0
        %v2076 = vsel %vm1993, %v2023, 0.0
        %v2077 = vsel %vm1994, %v2027, 0.0
        %v2078 = vsel %vm1995, %v2023, 0.0
        %v2079 = vsel %vm1996, %v2027, 0.0
        %v2080 = vsel %vm1997, %v2023, 0.0
        %v2081 = vsel %vm1998, %v2027, 0.0
        %v2082 = vsel %vm1999, %v2023, 0.0
        %v2083 = vsel %vm2000, %v2027, 0.0
        %v2084 = vsel %vm2001, %v2023, 0.0
        %v2085 = vsel %vm2002, %v2027, 0.0
        %v2086 = vsel %vm2003, %v2023, 0.0
        %v2087 = vsel %vm2004, %v2027, 0.0
        %v2088 = vsel %vm2005, %v2023, 0.0
        %v2089 = vsel %vm2006, %v2027, 0.0
        %v2090 = vsel %vm2007, %v2023, 0.0
        %v2091 = vsel %vm2008, %v2027, 0.0
        %v2092 = vadd.f32 %v1865, %v2028
        %v2093 = vadd.f32 %v1866, %v2029
        %v2094 = vadd.f32 %v1867, %v2030
        %v2095 = vadd.f32 %v1868, %v2031
        %v2096 = vadd.f32 %v1869, %v2032
        %v2097 = vadd.f32 %v1870, %v2033
        %v2098 = vadd.f32 %v1871, %v2034
        %v2099 = vadd.f32 %v1872, %v2035
        %v2100 = vadd.f32 %v1873, %v2036
        %v2101 = vadd.f32 %v1874, %v2037
        %v2102 = vadd.f32 %v1875, %v2038
        %v2103 = vadd.f32 %v1876, %v2039
        %v2104 = vadd.f32 %v1877, %v2040
        %v2105 = vadd.f32 %v1878, %v2041
        %v2106 = vadd.f32 %v1879, %v2042
        %v2107 = vadd.f32 %v1880, %v2043
        %v2108 = vadd.f32 %v1881, %v2044
        %v2109 = vadd.f32 %v1882, %v2045
        %v2110 = vadd.f32 %v1883, %v2046
        %v2111 = vadd.f32 %v1884, %v2047
        %v2112 = vadd.f32 %v1885, %v2048
        %v2113 = vadd.f32 %v1886, %v2049
        %v2114 = vadd.f32 %v1887, %v2050
        %v2115 = vadd.f32 %v1888, %v2051
        %v2116 = vadd.f32 %v1889, %v2052
        %v2117 = vadd.f32 %v1890, %v2053
        %v2118 = vadd.f32 %v1891, %v2054
        %v2119 = vadd.f32 %v1892, %v2055
        %v2120 = vadd.f32 %v1893, %v2056
        %v2121 = vadd.f32 %v1894, %v2057
        %v2122 = vadd.f32 %v1895, %v2058
        %v2123 = vadd.f32 %v1896, %v2059
        %v2124 = vadd.f32 %v1897, %v2060
        %v2125 = vadd.f32 %v1898, %v2061
        %v2126 = vadd.f32 %v1899, %v2062
        %v2127 = vadd.f32 %v1900, %v2063
        %v2128 = vadd.f32 %v1901, %v2064
        %v2129 = vadd.f32 %v1902, %v2065
        %v2130 = vadd.f32 %v1903, %v2066
        %v2131 = vadd.f32 %v1904, %v2067
        %v2132 = vadd.f32 %v1905, %v2068
        %v2133 = vadd.f32 %v1906, %v2069
        %v2134 = vadd.f32 %v1907, %v2070
        %v2135 = vadd.f32 %v1908, %v2071
        %v2136 = vadd.f32 %v1909, %v2072
        %v2137 = vadd.f32 %v1910, %v2073
        %v2138 = vadd.f32 %v1911, %v2074
        %v2139 = vadd.f32 %v1912, %v2075
        %v2140 = vadd.f32 %v1913, %v2076
        %v2141 = vadd.f32 %v1914, %v2077
        %v2142 = vadd.f32 %v1915, %v2078
        %v2143 = vadd.f32 %v1916, %v2079
        %v2144 = vadd.f32 %v1917, %v2080
        %v2145 = vadd.f32 %v1918, %v2081
        %v2146 = vadd.f32 %v1919, %v2082
        %v2147 = vadd.f32 %v1920, %v2083
        %v2148 = vadd.f32 %v1921, %v2084
        %v2149 = vadd.f32 %v1922, %v2085
        %v2150 = vadd.f32 %v1923, %v2086
        %v2151 = vadd.f32 %v1924, %v2087
        %v2152 = vadd.f32 %v1925, %v2088
        %v2153 = vadd.f32 %v1926, %v2089
        %v2154 = vadd.f32 %v1927, %v2090
        %v2155 = vadd.f32 %v1928, %v2091
        %v2157 = vcombine.high %v1311, %v1311
        %2159 = vmatprep.subr.mxu0 %v2093
        %2160 = vmatpush1.msra.mxu0 %v2092
        %2161 = vmatprep.subr.mxu0 %v2095
        %2162 = vmatpush1.msra.mxu0 %v2094
        %2163 = vmatprep.subr.mxu0 %v2097
        %2164 = vmatpush1.msra.mxu0 %v2096
        %2165 = vmatprep.subr.mxu0 %v2099
        %2166 = vmatpush1.msra.mxu0 %v2098
        %2167 = vmatprep.subr.mxu0 %v2101
        %2168 = vmatpush1.msra.mxu0 %v2100
        %2169 = vmatprep.subr.mxu0 %v2103
        %2170 = vmatpush1.msra.mxu0 %v2102
        %2171 = vmatprep.subr.mxu0 %v2105
        %2172 = vmatpush1.msra.mxu0 %v2104
        %2173 = vmatprep.subr.mxu0 %v2107
        %2174 = vmatpush1.msra.mxu0 %v2106
        %2175 = vmatprep.subr.mxu0 %v2109
        %2176 = vmatpush1.msra.mxu0 %v2108
        %2177 = vmatprep.subr.mxu0 %v2111
        %2178 = vmatpush1.msra.mxu0 %v2110
        %2179 = vmatprep.subr.mxu0 %v2113
        %2180 = vmatpush1.msra.mxu0 %v2112
        %2181 = vmatprep.subr.mxu0 %v2115
        %2182 = vmatpush1.msra.mxu0 %v2114
        %2183 = vmatprep.subr.mxu0 %v2117
        %2184 = vmatpush1.msra.mxu0 %v2116
        %2185 = vmatprep.subr.mxu0 %v2119
        %2186 = vmatpush1.msra.mxu0 %v2118
        %2187 = vmatprep.subr.mxu0 %v2121
        %2188 = vmatpush1.msra.mxu0 %v2120
        %2189 = vmatprep.subr.mxu0 %v2123
        %2190 = vmatpush1.msra.mxu0 %v2122
        %2191 = vmatprep.subr.mxu0 %v2125
        %2192 = vmatpush1.msra.mxu0 %v2124
        %2193 = vmatprep.subr.mxu0 %v2127
        %2194 = vmatpush1.msra.mxu0 %v2126
        %2195 = vmatprep.subr.mxu0 %v2129
        %2196 = vmatpush1.msra.mxu0 %v2128
        %2197 = vmatprep.subr.mxu0 %v2131
        %2198 = vmatpush1.msra.mxu0 %v2130
        %2199 = vmatprep.subr.mxu0 %v2133
        %2200 = vmatpush1.msra.mxu0 %v2132
        %2201 = vmatprep.subr.mxu0 %v2135
        %2202 = vmatpush1.msra.mxu0 %v2134
        %2203 = vmatprep.subr.mxu0 %v2137
        %2204 = vmatpush1.msra.mxu0 %v2136
        %2205 = vmatprep.subr.mxu0 %v2139
        %2206 = vmatpush1.msra.mxu0 %v2138
        %2207 = vmatprep.subr.mxu0 %v2141
        %2208 = vmatpush1.msra.mxu0 %v2140
        %2209 = vmatprep.subr.mxu0 %v2143
        %2210 = vmatpush1.msra.mxu0 %v2142
        %2211 = vmatprep.subr.mxu0 %v2145
        %2212 = vmatpush1.msra.mxu0 %v2144
        %2213 = vmatprep.subr.mxu0 %v2147
        %2214 = vmatpush1.msra.mxu0 %v2146
        %2215 = vmatprep.subr.mxu0 %v2149
        %2216 = vmatpush1.msra.mxu0 %v2148
        %2217 = vmatprep.subr.mxu0 %v2151
        %2218 = vmatpush1.msra.mxu0 %v2150
        %2219 = vmatprep.subr.mxu0 %v2153
        %2220 = vmatpush1.msra.mxu0 %v2152
        %2221 = vmatprep.subr.mxu0 %v2155
        %2222 = vmatpush1.msra.mxu0 %v2154
        %2223 = vmatprep.mubr.f32.mxu0 %v2157
        %2224 = vmatmul.mubr.f32.gmra.mrb[0].mxu0 %v1311
        %v2225 = vpop.f32.mrb[0].mxu0
        %v2226 = vadd.f32 0.0, %v2225
        %v2227 = vpop.f32.mrb[0].mxu0
        %v2228 = vadd.f32 0.0, %v2227
        %2229 = vdwg.mxu0
        %v2232 = vcombine.low %v2226, %v2228
        %2234 = vst [vmem:[%s234] sm:$0xff] %v2232
        %s2235 = sand.u32 %s102, 1
        %s2236 = scalar_lea.sflag [#allocation6], %s2235
        %s2237 = sand.u32 %s102, 1
        %s2238 = smul.addr %s2237, 8
        %s2239 = scalar_lea.vmem [#allocation10], %s2238
        // Predicated region
        $region52: #{tpu_custom_call.1} parent=31 // pred_check
          %p2240 = pneg %p112
        $region53: #{tpu_custom_call.1} parent=31 // pred_check_branch
          %2242 = sbr.rel (%p2240) target = $region55
        $region54: #{tpu_custom_call.1} parent=31 // pred_region
          %s2244 = ssub.s32 128, 128
          %2245 = vsyncadd %s2236, %s2244
          %s2246 = smul.addr %s21, 2
          %s2247 = smul.addr %s2246, 64
          %s2248 = scalar_lea.hbm %s3, %s2247
          %s2250 = sshll.u32 %s2239, 4
          %s2251 = int_to_ptr.vmem [resolvable:$true] %s2250
          %2253 = dma.vmem_to_hbm [thread:$0]  %s2251, 128, %s2248, %s2236
        $region55: #{tpu_custom_call.1} parent=31 // pred_fallthru
          _
      $region32: #{tpu_custom_call.1} parent=5 // pred_fallthru
        _
      %p2254 = scmp.le.s32.totalorder 2, %s16
      // Predicated region
      $region56: #{tpu_custom_call.1} parent=5 // pred_check
        %p2255 = pneg %p2254
      $region57: #{tpu_custom_call.1} parent=5 // pred_check_branch
        %2257 = sbr.rel (%p2255) target = $region59
      $region58: #{tpu_custom_call.1} parent=5 // pred_region
        %s2258 = ssub.s32 %s16, 2
        // Predicated region
        $region60: #{tpu_custom_call.1} parent=58 // pred_check
          %p2259 = pneg %p118
        $region61: #{tpu_custom_call.1} parent=58 // pred_check_branch
          %2261 = sbr.rel (%p2259) target = $region63
        $region62: #{tpu_custom_call.1} parent=58 // pred_region
          %s2262 = sand.u32 %s103, 1
          %s2263 = scalar_lea.sflag [#allocation6], %s2262
          %s2264 = sand.u32 %s103, 1
          %s2265 = smul.addr %s2264, 8
          %s2266 = scalar_lea.vmem [#allocation10], %s2265
          %2267 = dma.done %s2263, 128
        $region63: #{tpu_custom_call.1} parent=58 // pred_fallthru
          _
      $region59: #{tpu_custom_call.1} parent=5 // pred_fallthru
        _
    $region6: #{tpu_custom_call.1} parent=1 // loop_footer
      %s20 = sadd.s32 1, %s16
    $region7: #{tpu_custom_call.1} parent=1 // loop_footer_branch
      %15 = sbr.rel target = $region3
    $region8: #{tpu_custom_call.1} parent=1 // loop_exit
      _
    %2268 = vsyncpa [#allocation5], 1
    %s2269 = scalar_lea.sflag [#allocation5], 1
    %2270 = vsyncpa %s2269, 1
    %2271 = vsyncpa [#allocation8], 1
    %2272 = vsyncpa [#allocation6], 1
    %s2273 = scalar_lea.sflag [#allocation6], 1
    %2274 = vsyncpa %s2273, 1

</llo_original>
